<compile_context>
chip_gen: v5e
topology: v5e:2x2
jax: 0.10.0
libtpu: 0.0.40
codegen_flags: <defaults>
</compile_context>

<pallas_src>
import functools

import jax
import jax.numpy as jnp
from jax.experimental import pallas as pl
from jax.experimental.pallas import tpu as pltpu


# ----------------------------------------------------------------------------- helpers


def _round_up(x, m):
    return ((x + m - 1) // m) * m


def _vmem_limit_bytes():
    cap = 128 * 1024 * 1024
    try:
        cap = int(getattr(pltpu.get_tpu_info(), "vmem_capacity_bytes", cap))
    except Exception:
        pass
    # Leave headroom: 3/4 of physical, never above 64 MiB (v7x: 48 MiB, v5e/v6e: 64 MiB).
    return min(64 * 1024 * 1024, (3 * cap) // 4)


# ----------------------------------------------------------------------------- kernels


def _proj_kernel(k_ref, v_ref, wk_ref, bk_ref, wv_ref, bv_ref,
                 ek_ref, ekv_ref, sek_ref, sekv_ref, *, tq, t_valid):
    """Per (batch, seq tile): K/V projections, exp(K), exp(K)*V, and running f32 column
    sums  sum_j exp(k_j)  /  sum_j exp(k_j)*v_j  (the 'ones' part of exp(w*mask))."""
    t = pl.program_id(1)

    key = jnp.dot(k_ref[0], wk_ref[...], preferred_element_type=jnp.float32) + bk_ref[...]
    val = jnp.dot(v_ref[0], wv_ref[...], preferred_element_type=jnp.float32) + bv_ref[...]

    ek = jnp.exp(key)
    # Zero padded sequence rows (row >= t_valid) so the global column sums and the banded
    # matmuls only ever see valid tokens.  (Relies on zero-padded weights; biases are
    # broadcast-added post-matmul — keep that invariant.)
    row = t * tq + jax.lax.broadcasted_iota(jnp.int32, ek.shape, 0)
    ek = jnp.where(row < t_valid, ek, 0.0)
    ekv = ek * val

    ek_ref[0] = ek.astype(jnp.bfloat16)
    ekv_ref[0] = ekv.astype(jnp.bfloat16)

    @pl.when(t == 0)
    def _():
        sek_ref[...] = jnp.zeros_like(sek_ref)
        sekv_ref[...] = jnp.zeros_like(sekv_ref)

    sek_ref[0] += jnp.sum(ek, axis=0, keepdims=True)
    sekv_ref[0] += jnp.sum(ekv, axis=0, keepdims=True)


def _attn_kernel(q_ref, wq_ref, bq_ref, band_ref, ek_ref, ekv_ref,
                 sek_ref, sekv_ref, wo_ref, bo_ref,
                 out_ref, num_ref, num_acc, den_acc, *, halo, n_t):
    """Per (batch, q tile, kv-neighbour tile): banded AFT attention + gating + out proj."""
    j = pl.program_id(2)
    kv = pl.program_id(1) + j - halo          # unclamped kv-tile index

    @pl.when(j == 0)
    def _():
        # exp(w_bias*mask) = 1 + mask*(exp(w_bias)-1): the "1" part is a column sum over
        # all valid keys, identical for every query row.
        num_acc[...] = jnp.broadcast_to(sekv_ref[0], num_acc.shape)
        den_acc[...] = jnp.broadcast_to(sek_ref[0], den_acc.shape)

    @pl.when(jnp.logical_and(kv >= 0, kv < n_t))
    def _():
        band = band_ref[...]                  # (tq, tq) bf16, zero off the band
        num_acc[...] += jnp.dot(band, ekv_ref[0], preferred_element_type=jnp.float32)
        den_acc[...] += jnp.dot(band, ek_ref[0], preferred_element_type=jnp.float32)

    @pl.when(j == pl.num_programs(2) - 1)
    def _():
        qg = jax.nn.sigmoid(
            jnp.dot(q_ref[0], wq_ref[...], preferred_element_type=jnp.float32)
            + bq_ref[...])
        num = qg * num_acc[...]
        # approx reciprocal (EUP): ~1e-3 rel err, fine for this module's tolerance.
        x = num * pl.reciprocal(den_acc[...], approx=True)
        out = jnp.dot(x.astype(jnp.bfloat16), wo_ref[...],
                      preferred_element_type=jnp.float32) + bo_ref[...]
        out_ref[0] = out.astype(out_ref.dtype)
        num_ref[0] = num.astype(num_ref.dtype)    # bf16 writeback (module's 2nd output)


# ----------------------------------------------------------------------------- forward


def _forward_padded(q, k, v, wq, bq, wk, bk, wv, bv, wo, bo, band,
                    *, tq, halo, t_valid):
    """Both pallas_calls on padded, pre-cast operands.  q/k/v: (B, Tp, Dp) bf16."""
    B, Tp, Dp = q.shape
    n_t = Tp // tq
    n_kv = 2 * halo + 1
    f32, bf16 = jnp.float32, jnp.bfloat16
    vmem_limit = _vmem_limit_bytes()

    # ------------------------- kernel 1: K/V projections + column sums -----------------
    tile2 = pl.BlockSpec((1, tq, Dp), lambda b, t: (b, t, 0))
    sum2 = pl.BlockSpec((1, 1, Dp), lambda b, t: (b, 0, 0))
    w2 = pl.BlockSpec((Dp, Dp), lambda b, t: (0, 0))
    b2 = pl.BlockSpec((1, Dp), lambda b, t: (0, 0))

    proj_cost = pl.CostEstimate(
        flops=4 * B * Tp * Dp * Dp,
        transcendentals=B * Tp * Dp,
        bytes_accessed=(4 * B * Tp * Dp * 2          # k, v in + ek, ekv out (bf16)
                        + 2 * Dp * Dp * 2 + 2 * Dp * 4
                        + 2 * B * Dp * 4))

    ek, ekv, sek, sekv = pl.pallas_call(
        functools.partial(_proj_kernel, tq=tq, t_valid=t_valid),
        out_shape=(jax.ShapeDtypeStruct((B, Tp, Dp), bf16),
                   jax.ShapeDtypeStruct((B, Tp, Dp), bf16),
                   jax.ShapeDtypeStruct((B, 1, Dp), f32),
                   jax.ShapeDtypeStruct((B, 1, Dp), f32)),
        grid_spec=pltpu.PrefetchScalarGridSpec(
            num_scalar_prefetch=0,
            grid=(B, n_t),
            in_specs=[tile2, tile2, w2, b2, w2, b2],
            out_specs=[tile2, tile2, sum2, sum2]),
        compiler_params=pltpu.CompilerParams(
            dimension_semantics=("parallel", "arbitrary"),
            vmem_limit_bytes=vmem_limit),
        cost_estimate=proj_cost,
    )(k, v, wk, bk, wv, bv)

    # ------------------- kernel 2: banded attention + gating + output proj -------------
    def kv_idx(t, j):
        return jnp.maximum(jnp.minimum(t + j - halo, n_t - 1), 0)

    q_spec = pl.BlockSpec((1, tq, Dp), lambda b, t, j: (b, t, 0))
    band_spec = pl.BlockSpec((tq, tq), lambda b, t, j: (t, kv_idx(t, j)))
    kv_spec = pl.BlockSpec((1, tq, Dp), lambda b, t, j: (b, kv_idx(t, j), 0))
    sum3 = pl.BlockSpec((1, 1, Dp), lambda b, t, j: (b, 0, 0))
    w3 = pl.BlockSpec((Dp, Dp), lambda b, t, j: (0, 0))
    b3 = pl.BlockSpec((1, Dp), lambda b, t, j: (0, 0))
    out_spec = pl.BlockSpec((1, tq, Dp), lambda b, t, j: (b, t, 0))

    attn_cost = pl.CostEstimate(
        flops=4 * B * Tp * Dp * Dp + 4 * B * n_t * n_kv * tq * tq * Dp,
        transcendentals=2 * B * Tp * Dp,
        bytes_accessed=(B * Tp * Dp * 2                      # q
                        + 2 * B * n_t * n_kv * tq * Dp * 2   # ek / ekv tiles
                        + B * n_t * n_kv * tq * tq * 2       # band tiles
                        + 2 * Dp * Dp * 2 + 2 * Dp * 4
                        + 2 * B * Dp * 4
                        + B * Tp * Dp * (4 + 2)))            # out f32 + num bf16

    out, num = pl.pallas_call(
        functools.partial(_attn_kernel, halo=halo, n_t=n_t),
        out_shape=(jax.ShapeDtypeStruct((B, Tp, Dp), f32),
                   jax.ShapeDtypeStruct((B, Tp, Dp), bf16)),
        grid_spec=pltpu.PrefetchScalarGridSpec(
            num_scalar_prefetch=0,
            grid=(B, n_t, n_kv),
            in_specs=[q_spec, w3, b3, band_spec, kv_spec, kv_spec,
                      sum3, sum3, w3, b3],
            out_specs=[out_spec, out_spec],
            scratch_shapes=[pltpu.VMEM((tq, Dp), f32),
                            pltpu.VMEM((tq, Dp), f32)]),
        compiler_params=pltpu.CompilerParams(
            dimension_semantics=("parallel", "parallel", "arbitrary"),
            vmem_limit_bytes=vmem_limit),
        cost_estimate=attn_cost,
    )(q, wq, bq, band, ek, ekv, sek, sekv, wo, bo)

    return out, num


@functools.partial(jax.jit, static_argnames=("tq", "halo", "t_valid", "d_valid"))
def _aft_forward(q, k, v, prepared, *, tq, halo, t_valid, d_valid):
    Tp = prepared["band"].shape[0]
    Dp = prepared["wq"].shape[0]
    f32, bf16 = jnp.float32, jnp.bfloat16

    def pad_seq(x):
        return jnp.pad(x.astype(f32),
                       ((0, 0), (0, Tp - t_valid), (0, Dp - d_valid))).astype(bf16)

    out_p, num_p = _forward_padded(
        pad_seq(q), pad_seq(k), pad_seq(v),
        prepared["wq"], prepared["bq"], prepared["wk"], prepared["bk"],
        prepared["wv"], prepared["bv"], prepared["wo"], prepared["bo"],
        prepared["band"],
        tq=tq, halo=halo, t_valid=t_valid)

    out = out_p[:, :t_valid, :d_valid]
    num = num_p[:, :t_valid, :d_valid].astype(f32)
    return out, num


def prepare_aft_params(params, *, local_window_size, tq=None):
    """One-time, per-parameter-set preparation (pad + cast weights, build band)."""
    D = params["wq"].shape[0]
    T = params["w_bias"].shape[0]
    f32, bf16 = jnp.float32, jnp.bfloat16

    # Lane-dense last dim; D > 128 padded to 256 multiples for v6e/v7x's 256-wide MXU.
    Dp = _round_up(D, 128) if D <= 128 else _round_up(D, 256)
    if tq is None:
        # TODO(synk): pick tq per chip generation (128 on v5e, >=256 on v6e/v7x).
        tq = min(256, _round_up(T, 16))
    tq = _round_up(tq, 16)
    Tp = _round_up(T, tq)
    halo = (max(local_window_size - 1, 0) + tq - 1) // tq    # ceil((w-1)/tq)

    def pad_w(w):       # [in, out] -> [Dp, Dp] bf16
        return jnp.pad(w.astype(f32), ((0, Dp - D), (0, Dp - D))).astype(bf16)

    def pad_b(b):       # [1, D] -> [1, Dp] f32 (added post-accumulation in f32)
        return jnp.pad(b.astype(f32).reshape(1, -1), ((0, 0), (0, Dp - D)))

    # Banded correction term: exp(w_bias*mask) = 1 + mask*(exp(w_bias)-1).
    # Zero off the band and on padded rows/cols (padded K rows are also zeroed in-kernel).
    band = params["local_mask"].astype(f32) * jnp.expm1(params["w_bias"].astype(f32))
    band = jnp.pad(band, ((0, Tp - T), (0, Tp - T))).astype(bf16)

    prepared = dict(
        wq=pad_w(params["wq"]), bq=pad_b(params["bq"]),
        wk=pad_w(params["wk"]), bk=pad_b(params["bk"]),
        wv=pad_w(params["wv"]), bv=pad_b(params["bv"]),
        wo=pad_w(params["wo"]), bo=pad_b(params["bo"]),
        band=band)
    static = dict(T=T, D=D, Tp=Tp, Dp=Dp, tq=tq, halo=halo)
    return prepared, static


def aft_local_attention(q, k, v, prepared, static):
    """q, k, v: [B, T, D] float32. Returns (output, num) like the PyTorch module."""
    return _aft_forward(q, k, v, prepared,
                        tq=static["tq"], halo=static["halo"],
                        t_valid=static["T"], d_valid=static["D"])


# --------------------------------------------------------------------- params / reference


def get_local_mask(seq_len, local_window_size):
    # Band mask: |i - j| <= local_window_size - 1 (tril(k=w-1) & triu(k=-(w-1)))
    i = jnp.arange(seq_len)[:, None]
    j = jnp.arange(seq_len)[None, :]
    band = jnp.abs(i - j) <= (local_window_size - 1)
    return band.astype(jnp.float32)


def init_params(key, d_model, seq_len, local_window_size):
    ks = jax.random.split(key, 8)

    def xavier(k, fan_in, fan_out, shape):
        bound = (6.0 / (fan_in + fan_out)) ** 0.5
        return jax.random.uniform(k, shape, jnp.float32, -bound, bound)

    D = d_model
    return {
        # Weights stored as [in, out] (pre-transposed vs. PyTorch's [out, in]).
        "wq": xavier(ks[0], D, D, (D, D)),
        "bq": xavier(ks[1], D, D, (1, D)) * 0.1,
        "wk": xavier(ks[2], D, D, (D, D)),
        "bk": xavier(ks[3], D, D, (1, D)) * 0.1,
        "wv": xavier(ks[4], D, D, (D, D)),
        "bv": xavier(ks[5], D, D, (1, D)) * 0.1,
        "w_bias": xavier(ks[6], seq_len, seq_len, (seq_len, seq_len)),
        "local_mask": get_local_mask(seq_len, local_window_size),
        "wo": xavier(ks[7], D, D, (D, D)),
        "bo": jnp.zeros((1, D), jnp.float32),
    }


def reference_forward(q, k, v, p):
    """Plain-JAX f32 reference mirroring the PyTorch module."""
    query = q @ p["wq"] + p["bq"]
    key = k @ p["wk"] + p["bk"]
    value = v @ p["wv"] + p["bv"]
    w_bias = (p["w_bias"] * p["local_mask"])[None, :, :]
    Q_ = jax.nn.sigmoid(query)
    num = jnp.exp(w_bias) @ (jnp.exp(key) * value)
    den = jnp.exp(w_bias) @ jnp.exp(key)
    num = Q_ * num
    x = num / den
    return x @ p["wo"] + p["bo"], num


# ----------------------------------------------------------------------------------- main


if __name__ == "__main__":
    B, T, D = 2, 8, 32
    local_window = 3

    key = jax.random.PRNGKey(0)
    kq, kk, kvk, kp = jax.random.split(key, 4)
    q = jax.random.normal(kq, (B, T, D), jnp.float32)
    k = jax.random.normal(kk, (B, T, D), jnp.float32)
    v = jax.random.normal(kvk, (B, T, D), jnp.float32)

    params = init_params(kp, D, T, local_window)
    prepared, static = prepare_aft_params(params, local_window_size=local_window)

    out, num = aft_local_attention(q, k, v, prepared, static)
    out, num = jax.block_until_ready((out, num))

    ref_out, ref_num = reference_forward(q, k, v, params)

    def rel_err(a, b):
        return float(jnp.max(jnp.abs(a - b)) / (jnp.max(jnp.abs(b)) + 1e-6))

    # bf16 MXU operands + approx reciprocal: check to bf16-level tolerance vs f32 reference.
    assert rel_err(out, ref_out) < 5e-2, f"out rel err {rel_err(out, ref_out)}"
    assert rel_err(num, ref_num) < 5e-2, f"num rel err {rel_err(num, ref_num)}"

    print("KERNEL_OK")
</pallas_src>

<mosaic_0001>
module attributes {stable_mosaic.version = 11 : i64} {
  func.func @_attn_kernel(%arg0: i32, %arg1: i32, %arg2: i32, %arg3: memref<1x16x128xbf16, #tpu.memory_space<vmem>>, %arg4: memref<128x128xbf16, #tpu.memory_space<vmem>>, %arg5: memref<1x128xf32, #tpu.memory_space<vmem>>, %arg6: memref<16x16xbf16, #tpu.memory_space<vmem>>, %arg7: memref<1x16x128xbf16, #tpu.memory_space<vmem>>, %arg8: memref<1x16x128xbf16, #tpu.memory_space<vmem>>, %arg9: memref<1x1x128xf32, #tpu.memory_space<vmem>>, %arg10: memref<1x1x128xf32, #tpu.memory_space<vmem>>, %arg11: memref<128x128xbf16, #tpu.memory_space<vmem>>, %arg12: memref<1x128xf32, #tpu.memory_space<vmem>>, %arg13: memref<1x16x128xf32, #tpu.memory_space<vmem>>, %arg14: memref<1x16x128xbf16, #tpu.memory_space<vmem>>, %arg15: memref<16x128xf32, #tpu.memory_space<vmem>>, %arg16: memref<16x128xf32, #tpu.memory_space<vmem>>) attributes {dimension_semantics = [#tpu.dimension_semantics<parallel>, #tpu.dimension_semantics<parallel>, #tpu.dimension_semantics<arbitrary>], iteration_bounds = array<i64: 2, 1, 3>, scalar_prefetch = 0 : i64, scratch_operands = 2 : i64, tpu.core_type = #tpu.core_type<tc>, window_params = [{transform_indices = @transform_0, window_bounds = array<i64: 1, 16, 128>}, {pipeline_mode = #tpu.pipeline_mode<synchronous>, transform_indices = @transform_1, window_bounds = array<i64: 128, 128>}, {pipeline_mode = #tpu.pipeline_mode<synchronous>, transform_indices = @transform_2, window_bounds = array<i64: 1, 128>}, {transform_indices = @transform_3, window_bounds = array<i64: 16, 16>}, {transform_indices = @transform_4, window_bounds = array<i64: 1, 16, 128>}, {transform_indices = @transform_5, window_bounds = array<i64: 1, 16, 128>}, {transform_indices = @transform_6, window_bounds = array<i64: 1, 1, 128>}, {transform_indices = @transform_7, window_bounds = array<i64: 1, 1, 128>}, {pipeline_mode = #tpu.pipeline_mode<synchronous>, transform_indices = @transform_8, window_bounds = array<i64: 128, 128>}, {pipeline_mode = #tpu.pipeline_mode<synchronous>, transform_indices = @transform_9, window_bounds = array<i64: 1, 128>}, {transform_indices = @transform_10, window_bounds = array<i64: 1, 16, 128>}, {transform_indices = @transform_11, window_bounds = array<i64: 1, 16, 128>}]} {
    %0 = arith.addi %arg1, %arg2 : i32
    %c1_i32 = arith.constant 1 : i32
    %1 = arith.subi %0, %c1_i32 : i32
    %c0_i32 = arith.constant 0 : i32
    %2 = arith.cmpi eq, %arg2, %c0_i32 : i32
    %3 = arith.extui %2 : i1 to i32
    %c0_i32_0 = arith.constant 0 : i32
    %4 = arith.cmpi ne, %3, %c0_i32_0 : i32
    scf.if %4 {
      %c0 = arith.constant 0 : index
      %c0_5 = arith.constant 0 : index
      %c0_6 = arith.constant 0 : index
      %13 = vector.load %arg10[%c0, %c0_5, %c0_6] : memref<1x1x128xf32, #tpu.memory_space<vmem>>, vector<1x1x128xf32>
      %14 = vector.shape_cast %13 : vector<1x1x128xf32> to vector<1x128xf32>
      %15 = vector.shape_cast %14 : vector<1x128xf32> to vector<1x128xf32>
      %16 = vector.broadcast %15 : vector<1x128xf32> to vector<16x128xf32>
      %c0_7 = arith.constant 0 : index
      %c0_8 = arith.constant 0 : index
      %17 = vector.load %arg15[%c0_7, %c0_8] : memref<16x128xf32, #tpu.memory_space<vmem>>, vector<16x128xf32>
      tpu.vector_store %arg15[%c0_7, %c0_8], %16 {strides = array<i32>} : memref<16x128xf32, #tpu.memory_space<vmem>>, vector<16x128xf32>,
      %c0_9 = arith.constant 0 : index
      %c0_10 = arith.constant 0 : index
      %c0_11 = arith.constant 0 : index
      %18 = vector.load %arg9[%c0_9, %c0_10, %c0_11] : memref<1x1x128xf32, #tpu.memory_space<vmem>>, vector<1x1x128xf32>
      %19 = vector.shape_cast %18 : vector<1x1x128xf32> to vector<1x128xf32>
      %20 = vector.shape_cast %19 : vector<1x128xf32> to vector<1x128xf32>
      %21 = vector.broadcast %20 : vector<1x128xf32> to vector<16x128xf32>
      %c0_12 = arith.constant 0 : index
      %c0_13 = arith.constant 0 : index
      %22 = vector.load %arg16[%c0_12, %c0_13] : memref<16x128xf32, #tpu.memory_space<vmem>>, vector<16x128xf32>
      tpu.vector_store %arg16[%c0_12, %c0_13], %21 {strides = array<i32>} : memref<16x128xf32, #tpu.memory_space<vmem>>, vector<16x128xf32>,
    } else {
    }
    %c0_i32_1 = arith.constant 0 : i32
    %5 = arith.cmpi sge, %1, %c0_i32_1 : i32
    %c1_i32_2 = arith.constant 1 : i32
    %6 = arith.cmpi slt, %1, %c1_i32_2 : i32
    %7 = arith.andi %5, %6 : i1
    %8 = arith.extui %7 : i1 to i32
    %c0_i32_3 = arith.constant 0 : i32
    %9 = arith.cmpi ne, %8, %c0_i32_3 : i32
    scf.if %9 {
      %c0 = arith.constant 0 : index
      %c0_5 = arith.constant 0 : index
      %13 = vector.load %arg6[%c0, %c0_5] : memref<16x16xbf16, #tpu.memory_space<vmem>>, vector<16x16xbf16>
      %c0_6 = arith.constant 0 : index
      %c0_7 = arith.constant 0 : index
      %14 = vector.load %arg15[%c0_6, %c0_7] : memref<16x128xf32, #tpu.memory_space<vmem>>, vector<16x128xf32>
      %c0_8 = arith.constant 0 : index
      %c0_9 = arith.constant 0 : index
      %c0_10 = arith.constant 0 : index
      %15 = vector.load %arg8[%c0_8, %c0_9, %c0_10] : memref<1x16x128xbf16, #tpu.memory_space<vmem>>, vector<1x16x128xbf16>
      %16 = vector.shape_cast %15 : vector<1x16x128xbf16> to vector<16x128xbf16>
      %cst = arith.constant dense<0.000000e+00> : vector<16x128xf32>
      %17 = tpu.matmul %13, %16, %cst {dimension_numbers = #tpu.dot_dimension_numbers<[1], [0], [0], [1], [0, 0, 1, 1], [], []>} : vector<16x16xbf16>, vector<16x128xbf16>, vector<16x128xf32> -> vector<16x128xf32>
      %18 = arith.addf %14, %17 : vector<16x128xf32>
      %c0_11 = arith.constant 0 : index
      %c0_12 = arith.constant 0 : index
      %19 = vector.load %arg15[%c0_11, %c0_12] : memref<16x128xf32, #tpu.memory_space<vmem>>, vector<16x128xf32>
      tpu.vector_store %arg15[%c0_11, %c0_12], %18 {strides = array<i32>} : memref<16x128xf32, #tpu.memory_space<vmem>>, vector<16x128xf32>,
      %c0_13 = arith.constant 0 : index
      %c0_14 = arith.constant 0 : index
      %20 = vector.load %arg16[%c0_13, %c0_14] : memref<16x128xf32, #tpu.memory_space<vmem>>, vector<16x128xf32>
      %c0_15 = arith.constant 0 : index
      %c0_16 = arith.constant 0 : index
      %c0_17 = arith.constant 0 : index
      %21 = vector.load %arg7[%c0_15, %c0_16, %c0_17] : memref<1x16x128xbf16, #tpu.memory_space<vmem>>, vector<1x16x128xbf16>
      %22 = vector.shape_cast %21 : vector<1x16x128xbf16> to vector<16x128xbf16>
      %cst_18 = arith.constant dense<0.000000e+00> : vector<16x128xf32>
      %23 = tpu.matmul %13, %22, %cst_18 {dimension_numbers = #tpu.dot_dimension_numbers<[1], [0], [0], [1], [0, 0, 1, 1], [], []>} : vector<16x16xbf16>, vector<16x128xbf16>, vector<16x128xf32> -> vector<16x128xf32>
      %24 = arith.addf %20, %23 : vector<16x128xf32>
      %c0_19 = arith.constant 0 : index
      %c0_20 = arith.constant 0 : index
      %25 = vector.load %arg16[%c0_19, %c0_20] : memref<16x128xf32, #tpu.memory_space<vmem>>, vector<16x128xf32>
      tpu.vector_store %arg16[%c0_19, %c0_20], %24 {strides = array<i32>} : memref<16x128xf32, #tpu.memory_space<vmem>>, vector<16x128xf32>,
    } else {
    }
    %c2_i32 = arith.constant 2 : i32
    %10 = arith.cmpi eq, %arg2, %c2_i32 : i32
    %11 = arith.extui %10 : i1 to i32
    %c0_i32_4 = arith.constant 0 : i32
    %12 = arith.cmpi ne, %11, %c0_i32_4 : i32
    scf.if %12 {
      %c0 = arith.constant 0 : index
      %c0_5 = arith.constant 0 : index
      %c0_6 = arith.constant 0 : index
      %13 = vector.load %arg3[%c0, %c0_5, %c0_6] : memref<1x16x128xbf16, #tpu.memory_space<vmem>>, vector<1x16x128xbf16>
      %14 = vector.shape_cast %13 : vector<1x16x128xbf16> to vector<16x128xbf16>
      %c0_7 = arith.constant 0 : index
      %c0_8 = arith.constant 0 : index
      %15 = vector.load %arg4[%c0_7, %c0_8] : memref<128x128xbf16, #tpu.memory_space<vmem>>, vector<128x128xbf16>
      %cst = arith.constant dense<0.000000e+00> : vector<16x128xf32>
      %16 = tpu.matmul %14, %15, %cst {dimension_numbers = #tpu.dot_dimension_numbers<[1], [0], [0], [1], [0, 0, 1, 1], [], []>} : vector<16x128xbf16>, vector<128x128xbf16>, vector<16x128xf32> -> vector<16x128xf32>
      %c0_9 = arith.constant 0 : index
      %c0_10 = arith.constant 0 : index
      %17 = vector.load %arg5[%c0_9, %c0_10] : memref<1x128xf32, #tpu.memory_space<vmem>>, vector<1x128xf32>
      %18 = vector.broadcast %17 : vector<1x128xf32> to vector<16x128xf32>
      %19 = arith.addf %16, %18 : vector<16x128xf32>
      %20 = arith.negf %19 : vector<16x128xf32>
      %21 = math.exp %20 : vector<16x128xf32>
      %cst_11 = arith.constant 1.000000e+00 : f32
      %22 = vector.broadcast %cst_11 : f32 to vector<16x128xf32>
      %23 = arith.addf %22, %21 : vector<16x128xf32>
      %24 = arith.divf %22, %23 : vector<16x128xf32>
      %c0_12 = arith.constant 0 : index
      %c0_13 = arith.constant 0 : index
      %25 = vector.load %arg15[%c0_12, %c0_13] : memref<16x128xf32, #tpu.memory_space<vmem>>, vector<16x128xf32>
      %26 = arith.mulf %24, %25 : vector<16x128xf32>
      %c0_14 = arith.constant 0 : index
      %c0_15 = arith.constant 0 : index
      %27 = vector.load %arg16[%c0_14, %c0_15] : memref<16x128xf32, #tpu.memory_space<vmem>>, vector<16x128xf32>
      %28 = tpu.reciprocal %27 {approx = true} : vector<16x128xf32> -> vector<16x128xf32>
      %29 = arith.mulf %26, %28 : vector<16x128xf32>
      %30 = arith.truncf %29 : vector<16x128xf32> to vector<16x128xbf16>
      %c0_16 = arith.constant 0 : index
      %c0_17 = arith.constant 0 : index
      %31 = vector.load %arg11[%c0_16, %c0_17] : memref<128x128xbf16, #tpu.memory_space<vmem>>, vector<128x128xbf16>
      %cst_18 = arith.constant dense<0.000000e+00> : vector<16x128xf32>
      %32 = tpu.matmul %30, %31, %cst_18 {dimension_numbers = #tpu.dot_dimension_numbers<[1], [0], [0], [1], [0, 0, 1, 1], [], []>} : vector<16x128xbf16>, vector<128x128xbf16>, vector<16x128xf32> -> vector<16x128xf32>
      %c0_19 = arith.constant 0 : index
      %c0_20 = arith.constant 0 : index
      %33 = vector.load %arg12[%c0_19, %c0_20] : memref<1x128xf32, #tpu.memory_space<vmem>>, vector<1x128xf32>
      %34 = vector.broadcast %33 : vector<1x128xf32> to vector<16x128xf32>
      %35 = arith.addf %32, %34 : vector<16x128xf32>
      %c0_21 = arith.constant 0 : index
      %c0_22 = arith.constant 0 : index
      %c0_23 = arith.constant 0 : index
      %36 = vector.load %arg13[%c0_21, %c0_22, %c0_23] : memref<1x16x128xf32, #tpu.memory_space<vmem>>, vector<1x16x128xf32>
      %37 = vector.shape_cast %36 : vector<1x16x128xf32> to vector<16x128xf32>
      %38 = vector.shape_cast %35 : vector<16x128xf32> to vector<1x16x128xf32>
      tpu.vector_store %arg13[%c0_21, %c0_22, %c0_23], %38 {strides = array<i32>} : memref<1x16x128xf32, #tpu.memory_space<vmem>>, vector<1x16x128xf32>,
      %39 = arith.truncf %26 : vector<16x128xf32> to vector<16x128xbf16>
      %c0_24 = arith.constant 0 : index
      %c0_25 = arith.constant 0 : index
      %c0_26 = arith.constant 0 : index
      %40 = vector.load %arg14[%c0_24, %c0_25, %c0_26] : memref<1x16x128xbf16, #tpu.memory_space<vmem>>, vector<1x16x128xbf16>
      %41 = vector.shape_cast %40 : vector<1x16x128xbf16> to vector<16x128xbf16>
      %42 = vector.shape_cast %39 : vector<16x128xbf16> to vector<1x16x128xbf16>
      tpu.vector_store %arg14[%c0_24, %c0_25, %c0_26], %42 {strides = array<i32>} : memref<1x16x128xbf16, #tpu.memory_space<vmem>>, vector<1x16x128xbf16>,
    } else {
    }
    return
  }
  func.func @transform_0(%arg0: i32, %arg1: i32, %arg2: i32) -> (i32, i32, i32) {
    %c0_i32 = arith.constant 0 : i32
    %c0_i32_0 = arith.constant 0 : i32
    return %arg0, %arg1, %c0_i32 : i32, i32, i32
  }
  func.func @transform_1(%arg0: i32, %arg1: i32, %arg2: i32) -> (i32, i32) {
    %c0_i32 = arith.constant 0 : i32
    %c0_i32_0 = arith.constant 0 : i32
    %c0_i32_1 = arith.constant 0 : i32
    return %c0_i32, %c0_i32_0 : i32, i32
  }
  func.func @transform_2(%arg0: i32, %arg1: i32, %arg2: i32) -> (i32, i32) {
    %c0_i32 = arith.constant 0 : i32
    %c0_i32_0 = arith.constant 0 : i32
    %c0_i32_1 = arith.constant 0 : i32
    return %c0_i32, %c0_i32_0 : i32, i32
  }
  func.func @transform_3(%arg0: i32, %arg1: i32, %arg2: i32) -> (i32, i32) {
    %0 = arith.addi %arg1, %arg2 : i32
    %c1_i32 = arith.constant 1 : i32
    %1 = arith.subi %0, %c1_i32 : i32
    %c0_i32 = arith.constant 0 : i32
    %2 = arith.minsi %1, %c0_i32 : i32
    %c0_i32_0 = arith.constant 0 : i32
    %3 = arith.maxsi %2, %c0_i32_0 : i32
    %c0_i32_1 = arith.constant 0 : i32
    return %arg1, %3 : i32, i32
  }
  func.func @transform_4(%arg0: i32, %arg1: i32, %arg2: i32) -> (i32, i32, i32) {
    %0 = arith.addi %arg1, %arg2 : i32
    %c1_i32 = arith.constant 1 : i32
    %1 = arith.subi %0, %c1_i32 : i32
    %c0_i32 = arith.constant 0 : i32
    %2 = arith.minsi %1, %c0_i32 : i32
    %c0_i32_0 = arith.constant 0 : i32
    %3 = arith.maxsi %2, %c0_i32_0 : i32
    %c0_i32_1 = arith.constant 0 : i32
    %c0_i32_2 = arith.constant 0 : i32
    return %arg0, %3, %c0_i32_1 : i32, i32, i32
  }
  func.func @transform_5(%arg0: i32, %arg1: i32, %arg2: i32) -> (i32, i32, i32) {
    %0 = arith.addi %arg1, %arg2 : i32
    %c1_i32 = arith.constant 1 : i32
    %1 = arith.subi %0, %c1_i32 : i32
    %c0_i32 = arith.constant 0 : i32
    %2 = arith.minsi %1, %c0_i32 : i32
    %c0_i32_0 = arith.constant 0 : i32
    %3 = arith.maxsi %2, %c0_i32_0 : i32
    %c0_i32_1 = arith.constant 0 : i32
    %c0_i32_2 = arith.constant 0 : i32
    return %arg0, %3, %c0_i32_1 : i32, i32, i32
  }
  func.func @transform_6(%arg0: i32, %arg1: i32, %arg2: i32) -> (i32, i32, i32) {
    %c0_i32 = arith.constant 0 : i32
    %c0_i32_0 = arith.constant 0 : i32
    %c0_i32_1 = arith.constant 0 : i32
    return %arg0, %c0_i32, %c0_i32_0 : i32, i32, i32
  }
  func.func @transform_7(%arg0: i32, %arg1: i32, %arg2: i32) -> (i32, i32, i32) {
    %c0_i32 = arith.constant 0 : i32
    %c0_i32_0 = arith.constant 0 : i32
    %c0_i32_1 = arith.constant 0 : i32
    return %arg0, %c0_i32, %c0_i32_0 : i32, i32, i32
  }
  func.func @transform_8(%arg0: i32, %arg1: i32, %arg2: i32) -> (i32, i32) {
    %c0_i32 = arith.constant 0 : i32
    %c0_i32_0 = arith.constant 0 : i32
    %c0_i32_1 = arith.constant 0 : i32
    return %c0_i32, %c0_i32_0 : i32, i32
  }
  func.func @transform_9(%arg0: i32, %arg1: i32, %arg2: i32) -> (i32, i32) {
    %c0_i32 = arith.constant 0 : i32
    %c0_i32_0 = arith.constant 0 : i32
    %c0_i32_1 = arith.constant 0 : i32
    return %c0_i32, %c0_i32_0 : i32, i32
  }
  func.func @transform_10(%arg0: i32, %arg1: i32, %arg2: i32) -> (i32, i32, i32) {
    %c0_i32 = arith.constant 0 : i32
    %c0_i32_0 = arith.constant 0 : i32
    return %arg0, %arg1, %c0_i32 : i32, i32, i32
  }
  func.func @transform_11(%arg0: i32, %arg1: i32, %arg2: i32) -> (i32, i32, i32) {
    %c0_i32 = arith.constant 0 : i32
    %c0_i32_0 = arith.constant 0 : i32
    return %arg0, %arg1, %c0_i32 : i32, i32, i32
  }
}

module attributes {stable_mosaic.version = 11 : i64} {
  func.func @_proj_kernel(%arg0: i32, %arg1: i32, %arg2: memref<1x16x128xbf16, #tpu.memory_space<vmem>>, %arg3: memref<1x16x128xbf16, #tpu.memory_space<vmem>>, %arg4: memref<128x128xbf16, #tpu.memory_space<vmem>>, %arg5: memref<1x128xf32, #tpu.memory_space<vmem>>, %arg6: memref<128x128xbf16, #tpu.memory_space<vmem>>, %arg7: memref<1x128xf32, #tpu.memory_space<vmem>>, %arg8: memref<1x16x128xbf16, #tpu.memory_space<vmem>>, %arg9: memref<1x16x128xbf16, #tpu.memory_space<vmem>>, %arg10: memref<1x1x128xf32, #tpu.memory_space<vmem>>, %arg11: memref<1x1x128xf32, #tpu.memory_space<vmem>>) attributes {dimension_semantics = [#tpu.dimension_semantics<parallel>, #tpu.dimension_semantics<arbitrary>], iteration_bounds = array<i64: 2, 1>, scalar_prefetch = 0 : i64, scratch_operands = 0 : i64, tpu.core_type = #tpu.core_type<tc>, window_params = [{transform_indices = @transform_0, window_bounds = array<i64: 1, 16, 128>}, {transform_indices = @transform_1, window_bounds = array<i64: 1, 16, 128>}, {pipeline_mode = #tpu.pipeline_mode<synchronous>, transform_indices = @transform_2, window_bounds = array<i64: 128, 128>}, {pipeline_mode = #tpu.pipeline_mode<synchronous>, transform_indices = @transform_3, window_bounds = array<i64: 1, 128>}, {pipeline_mode = #tpu.pipeline_mode<synchronous>, transform_indices = @transform_4, window_bounds = array<i64: 128, 128>}, {pipeline_mode = #tpu.pipeline_mode<synchronous>, transform_indices = @transform_5, window_bounds = array<i64: 1, 128>}, {transform_indices = @transform_6, window_bounds = array<i64: 1, 16, 128>}, {transform_indices = @transform_7, window_bounds = array<i64: 1, 16, 128>}, {transform_indices = @transform_8, window_bounds = array<i64: 1, 1, 128>}, {transform_indices = @transform_9, window_bounds = array<i64: 1, 1, 128>}]} {
    %c0 = arith.constant 0 : index
    %c0_0 = arith.constant 0 : index
    %c0_1 = arith.constant 0 : index
    %0 = vector.load %arg2[%c0, %c0_0, %c0_1] : memref<1x16x128xbf16, #tpu.memory_space<vmem>>, vector<1x16x128xbf16>
    %1 = vector.shape_cast %0 : vector<1x16x128xbf16> to vector<16x128xbf16>
    %c0_2 = arith.constant 0 : index
    %c0_3 = arith.constant 0 : index
    %2 = vector.load %arg4[%c0_2, %c0_3] : memref<128x128xbf16, #tpu.memory_space<vmem>>, vector<128x128xbf16>
    %cst = arith.constant dense<0.000000e+00> : vector<16x128xf32>
    %3 = tpu.matmul %1, %2, %cst {dimension_numbers = #tpu.dot_dimension_numbers<[1], [0], [0], [1], [0, 0, 1, 1], [], []>} : vector<16x128xbf16>, vector<128x128xbf16>, vector<16x128xf32> -> vector<16x128xf32>
    %c0_4 = arith.constant 0 : index
    %c0_5 = arith.constant 0 : index
    %4 = vector.load %arg5[%c0_4, %c0_5] : memref<1x128xf32, #tpu.memory_space<vmem>>, vector<1x128xf32>
    %5 = vector.broadcast %4 : vector<1x128xf32> to vector<16x128xf32>
    %6 = arith.addf %3, %5 : vector<16x128xf32>
    %c0_6 = arith.constant 0 : index
    %c0_7 = arith.constant 0 : index
    %c0_8 = arith.constant 0 : index
    %7 = vector.load %arg3[%c0_6, %c0_7, %c0_8] : memref<1x16x128xbf16, #tpu.memory_space<vmem>>, vector<1x16x128xbf16>
    %8 = vector.shape_cast %7 : vector<1x16x128xbf16> to vector<16x128xbf16>
    %c0_9 = arith.constant 0 : index
    %c0_10 = arith.constant 0 : index
    %9 = vector.load %arg6[%c0_9, %c0_10] : memref<128x128xbf16, #tpu.memory_space<vmem>>, vector<128x128xbf16>
    %cst_11 = arith.constant dense<0.000000e+00> : vector<16x128xf32>
    %10 = tpu.matmul %8, %9, %cst_11 {dimension_numbers = #tpu.dot_dimension_numbers<[1], [0], [0], [1], [0, 0, 1, 1], [], []>} : vector<16x128xbf16>, vector<128x128xbf16>, vector<16x128xf32> -> vector<16x128xf32>
    %c0_12 = arith.constant 0 : index
    %c0_13 = arith.constant 0 : index
    %11 = vector.load %arg7[%c0_12, %c0_13] : memref<1x128xf32, #tpu.memory_space<vmem>>, vector<1x128xf32>
    %12 = vector.broadcast %11 : vector<1x128xf32> to vector<16x128xf32>
    %13 = arith.addf %10, %12 : vector<16x128xf32>
    %14 = math.exp %6 : vector<16x128xf32>
    %c16_i32 = arith.constant 16 : i32
    %15 = arith.muli %arg1, %c16_i32 : i32
    %16 = tpu.iota {dimensions = array<i32: 0>} : vector<16x128xi32>
    %17 = vector.broadcast %15 : i32 to vector<16x128xi32>
    %18 = arith.addi %17, %16 : vector<16x128xi32>
    %c8_i32 = arith.constant 8 : i32
    %19 = vector.broadcast %c8_i32 : i32 to vector<16x128xi32>
    %20 = arith.cmpi slt, %18, %19 : vector<16x128xi32>
    %cst_14 = arith.constant 0.000000e+00 : f32
    %21 = vector.broadcast %cst_14 : f32 to vector<16x128xf32>
    %22 = arith.select %20, %14, %21 : vector<16x128xi1>, vector<16x128xf32>
    %23 = arith.mulf %22, %13 : vector<16x128xf32>
    %24 = arith.truncf %22 : vector<16x128xf32> to vector<16x128xbf16>
    %c0_15 = arith.constant 0 : index
    %c0_16 = arith.constant 0 : index
    %c0_17 = arith.constant 0 : index
    %25 = vector.load %arg8[%c0_15, %c0_16, %c0_17] : memref<1x16x128xbf16, #tpu.memory_space<vmem>>, vector<1x16x128xbf16>
    %26 = vector.shape_cast %25 : vector<1x16x128xbf16> to vector<16x128xbf16>
    %27 = vector.shape_cast %24 : vector<16x128xbf16> to vector<1x16x128xbf16>
    tpu.vector_store %arg8[%c0_15, %c0_16, %c0_17], %27 {strides = array<i32>} : memref<1x16x128xbf16, #tpu.memory_space<vmem>>, vector<1x16x128xbf16>,
    %28 = arith.truncf %23 : vector<16x128xf32> to vector<16x128xbf16>
    %c0_18 = arith.constant 0 : index
    %c0_19 = arith.constant 0 : index
    %c0_20 = arith.constant 0 : index
    %29 = vector.load %arg9[%c0_18, %c0_19, %c0_20] : memref<1x16x128xbf16, #tpu.memory_space<vmem>>, vector<1x16x128xbf16>
    %30 = vector.shape_cast %29 : vector<1x16x128xbf16> to vector<16x128xbf16>
    %31 = vector.shape_cast %28 : vector<16x128xbf16> to vector<1x16x128xbf16>
    tpu.vector_store %arg9[%c0_18, %c0_19, %c0_20], %31 {strides = array<i32>} : memref<1x16x128xbf16, #tpu.memory_space<vmem>>, vector<1x16x128xbf16>,
    %c0_i32 = arith.constant 0 : i32
    %32 = arith.cmpi eq, %arg1, %c0_i32 : i32
    %33 = arith.extui %32 : i1 to i32
    %c0_i32_21 = arith.constant 0 : i32
    %34 = arith.cmpi ne, %33, %c0_i32_21 : i32
    scf.if %34 {
      %cst_36 = arith.constant 0.000000e+00 : f32
      %51 = vector.broadcast %cst_36 : f32 to vector<1x1x128xf32>
      %c0_37 = arith.constant 0 : index
      %c0_38 = arith.constant 0 : index
      %c0_39 = arith.constant 0 : index
      %52 = vector.load %arg10[%c0_37, %c0_38, %c0_39] : memref<1x1x128xf32, #tpu.memory_space<vmem>>, vector<1x1x128xf32>
      tpu.vector_store %arg10[%c0_37, %c0_38, %c0_39], %51 {strides = array<i32>} : memref<1x1x128xf32, #tpu.memory_space<vmem>>, vector<1x1x128xf32>,
      %cst_40 = arith.constant 0.000000e+00 : f32
      %53 = vector.broadcast %cst_40 : f32 to vector<1x1x128xf32>
      %c0_41 = arith.constant 0 : index
      %c0_42 = arith.constant 0 : index
      %c0_43 = arith.constant 0 : index
      %54 = vector.load %arg11[%c0_41, %c0_42, %c0_43] : memref<1x1x128xf32, #tpu.memory_space<vmem>>, vector<1x1x128xf32>
      tpu.vector_store %arg11[%c0_41, %c0_42, %c0_43], %53 {strides = array<i32>} : memref<1x1x128xf32, #tpu.memory_space<vmem>>, vector<1x1x128xf32>,
    } else {
    }
    %c0_22 = arith.constant 0 : index
    %c0_23 = arith.constant 0 : index
    %c0_24 = arith.constant 0 : index
    %35 = vector.load %arg10[%c0_22, %c0_23, %c0_24] : memref<1x1x128xf32, #tpu.memory_space<vmem>>, vector<1x1x128xf32>
    %36 = vector.shape_cast %35 : vector<1x1x128xf32> to vector<1x128xf32>
    %cst_25 = arith.constant dense<0.000000e+00> : vector<128xf32>
    %37 = vector.multi_reduction <add>, %22, %cst_25 [0] : vector<16x128xf32> to vector<128xf32>
    %38 = vector.shape_cast %37 : vector<128xf32> to vector<1x128xf32>
    %39 = arith.addf %36, %38 : vector<1x128xf32>
    %c0_26 = arith.constant 0 : index
    %c0_27 = arith.constant 0 : index
    %c0_28 = arith.constant 0 : index
    %40 = vector.load %arg10[%c0_26, %c0_27, %c0_28] : memref<1x1x128xf32, #tpu.memory_space<vmem>>, vector<1x1x128xf32>
    %41 = vector.shape_cast %40 : vector<1x1x128xf32> to vector<1x128xf32>
    %42 = vector.shape_cast %39 : vector<1x128xf32> to vector<1x1x128xf32>
    tpu.vector_store %arg10[%c0_26, %c0_27, %c0_28], %42 {strides = array<i32>} : memref<1x1x128xf32, #tpu.memory_space<vmem>>, vector<1x1x128xf32>,
    %c0_29 = arith.constant 0 : index
    %c0_30 = arith.constant 0 : index
    %c0_31 = arith.constant 0 : index
    %43 = vector.load %arg11[%c0_29, %c0_30, %c0_31] : memref<1x1x128xf32, #tpu.memory_space<vmem>>, vector<1x1x128xf32>
    %44 = vector.shape_cast %43 : vector<1x1x128xf32> to vector<1x128xf32>
    %cst_32 = arith.constant dense<0.000000e+00> : vector<128xf32>
    %45 = vector.multi_reduction <add>, %23, %cst_32 [0] : vector<16x128xf32> to vector<128xf32>
    %46 = vector.shape_cast %45 : vector<128xf32> to vector<1x128xf32>
    %47 = arith.addf %44, %46 : vector<1x128xf32>
    %c0_33 = arith.constant 0 : index
    %c0_34 = arith.constant 0 : index
    %c0_35 = arith.constant 0 : index
    %48 = vector.load %arg11[%c0_33, %c0_34, %c0_35] : memref<1x1x128xf32, #tpu.memory_space<vmem>>, vector<1x1x128xf32>
    %49 = vector.shape_cast %48 : vector<1x1x128xf32> to vector<1x128xf32>
    %50 = vector.shape_cast %47 : vector<1x128xf32> to vector<1x1x128xf32>
    tpu.vector_store %arg11[%c0_33, %c0_34, %c0_35], %50 {strides = array<i32>} : memref<1x1x128xf32, #tpu.memory_space<vmem>>, vector<1x1x128xf32>,
    return
  }
  func.func @transform_0(%arg0: i32, %arg1: i32) -> (i32, i32, i32) {
    %c0_i32 = arith.constant 0 : i32
    %c0_i32_0 = arith.constant 0 : i32
    return %arg0, %arg1, %c0_i32 : i32, i32, i32
  }
  func.func @transform_1(%arg0: i32, %arg1: i32) -> (i32, i32, i32) {
    %c0_i32 = arith.constant 0 : i32
    %c0_i32_0 = arith.constant 0 : i32
    return %arg0, %arg1, %c0_i32 : i32, i32, i32
  }
  func.func @transform_2(%arg0: i32, %arg1: i32) -> (i32, i32) {
    %c0_i32 = arith.constant 0 : i32
    %c0_i32_0 = arith.constant 0 : i32
    %c0_i32_1 = arith.constant 0 : i32
    return %c0_i32, %c0_i32_0 : i32, i32
  }
  func.func @transform_3(%arg0: i32, %arg1: i32) -> (i32, i32) {
    %c0_i32 = arith.constant 0 : i32
    %c0_i32_0 = arith.constant 0 : i32
    %c0_i32_1 = arith.constant 0 : i32
    return %c0_i32, %c0_i32_0 : i32, i32
  }
  func.func @transform_4(%arg0: i32, %arg1: i32) -> (i32, i32) {
    %c0_i32 = arith.constant 0 : i32
    %c0_i32_0 = arith.constant 0 : i32
    %c0_i32_1 = arith.constant 0 : i32
    return %c0_i32, %c0_i32_0 : i32, i32
  }
  func.func @transform_5(%arg0: i32, %arg1: i32) -> (i32, i32) {
    %c0_i32 = arith.constant 0 : i32
    %c0_i32_0 = arith.constant 0 : i32
    %c0_i32_1 = arith.constant 0 : i32
    return %c0_i32, %c0_i32_0 : i32, i32
  }
  func.func @transform_6(%arg0: i32, %arg1: i32) -> (i32, i32, i32) {
    %c0_i32 = arith.constant 0 : i32
    %c0_i32_0 = arith.constant 0 : i32
    return %arg0, %arg1, %c0_i32 : i32, i32, i32
  }
  func.func @transform_7(%arg0: i32, %arg1: i32) -> (i32, i32, i32) {
    %c0_i32 = arith.constant 0 : i32
    %c0_i32_0 = arith.constant 0 : i32
    return %arg0, %arg1, %c0_i32 : i32, i32, i32
  }
  func.func @transform_8(%arg0: i32, %arg1: i32) -> (i32, i32, i32) {
    %c0_i32 = arith.constant 0 : i32
    %c0_i32_0 = arith.constant 0 : i32
    %c0_i32_1 = arith.constant 0 : i32
    return %arg0, %c0_i32, %c0_i32_0 : i32, i32, i32
  }
  func.func @transform_9(%arg0: i32, %arg1: i32) -> (i32, i32, i32) {
    %c0_i32 = arith.constant 0 : i32
    %c0_i32_0 = arith.constant 0 : i32
    %c0_i32_1 = arith.constant 0 : i32
    return %arg0, %c0_i32, %c0_i32_0 : i32, i32, i32
  }
}

</mosaic_0001>

<llo_original>
// kernel: _aft_forward.2
$region0: #{_aft_forward.2}
  #allocation0 [shape = 'u32[]', space=smem, size = 0x4, offset = 0x4, fixed_abs, tag = 'smem constant byte address 0x4 - core index']
  #allocation1 [shape = 'u32[72,128]{1,0:T(1,128)}', space=vmem, size = 0x9000, scoped, tag = 'internal scratch']
  %s0 = inlined_call_operand.vmem [shape: bf16[2,16,128], index: 0, kind: input, shape index: {}]
  %s1 = inlined_call_operand.vmem [shape: bf16[2,16,128], index: 1, kind: input, shape index: {}]
  %s2 = inlined_call_operand.vmem [shape: bf16[128,128], index: 2, kind: input, shape index: {}]
  %s3 = inlined_call_operand.vmem [shape: f32[1,128], index: 3, kind: input, shape index: {}]
  %s4 = inlined_call_operand.vmem [shape: bf16[128,128], index: 4, kind: input, shape index: {}]
  %s5 = inlined_call_operand.vmem [shape: f32[1,128], index: 5, kind: input, shape index: {}]
  %s6 = inlined_call_operand.vmem [shape: bf16[2,16,128], index: 6, kind: output, shape index: {0}]
  %s7 = inlined_call_operand.vmem [shape: bf16[2,16,128], index: 7, kind: output, shape index: {1}]
  %s8 = inlined_call_operand.vmem [shape: f32[2,1,128], index: 8, kind: output, shape index: {2}]
  %s9 = inlined_call_operand.vmem [shape: f32[2,1,128], index: 9, kind: output, shape index: {3}]
  %10 = xla_tuple %s6, %s7, %s8, %s9
  %s11 = sld [smem:[#allocation0]]
  $region85: #{_aft_forward.2} parent=0
    _
  %s13 = ssub.s32 1, %s11
  %s14 = scalar_select 0, %s13, %s11
  loop: start=0, step=1, limit=4
  $region2: #{_aft_forward.2} parent=0 // loop_pre_header
    _
  $region3: #{_aft_forward.2} parent=0 // loop_header
    %s16 = sphi 0, %s20
    %p17 = scmp.ge.s32.totalorder %s16, 4
    %s23 = sphi 0, %s35
    %s24 = sphi 0, %s31
    %s25 = sphi 0, %s23
    %s26 = sphi 0, %s24
    %s27 = sphi 0, %s25
    %s28 = sphi 0, %s26
    %s40 = sphi 0, %s42
    %s43 = sphi 0, %s40
    %s44 = sphi 0, %s43
    %s60 = sphi 0, %s44
    %s68 = sphi 0, %s70
    %s71 = sphi 0, %s68
    %s72 = sphi 0, %s71
    %s88 = sphi 0, %s72
    %s92 = sphi 0, %s92
    %s94 = sphi 0, %s92
    %s95 = sphi 0, %s94
    %s109 = sphi 0, %s95
    %s113 = sphi 0, %s113
    %s115 = sphi 0, %s113
    %s116 = sphi 0, %s115
    %s130 = sphi 0, %s116
    %s134 = sphi 0, %s134
    %s136 = sphi 0, %s134
    %s137 = sphi 0, %s136
    %s151 = sphi 0, %s137
    %s155 = sphi 0, %s155
    %s157 = sphi 0, %s155
    %s158 = sphi 0, %s157
    %s172 = sphi 0, %s158
    %s180 = sphi 0, %s182
    %s183 = sphi 0, %s180
    %s184 = sphi 0, %s183
    %s200 = sphi 0, %s184
    %s208 = sphi 0, %s210
    %s211 = sphi 0, %s208
    %s212 = sphi 0, %s211
    %s228 = sphi 0, %s212
    %s234 = sphi 0, %s236
    %s237 = sphi 0, %s234
    %s238 = sphi 0, %s237
    %s254 = sphi 0, %s238
    %s260 = sphi 0, %s262
    %s263 = sphi 0, %s260
    %s264 = sphi 0, %s263
    %s280 = sphi 0, %s264
  $region4: #{_aft_forward.2} parent=0 // loop_header_branch
    %19 = sbr.rel (%p17) target = $region8
  $region5: #{_aft_forward.2} parent=0 // loop_body
    %s21 = ssub.s32 %s16, 1
    %s22 = ssub.s32 %s16, 2
    %s29 = sadd.s32 1, %s24
    %p30 = scmp.ge.s32.totalorder %s29, 1
    %s31 = scalar_select %p30, 0, %s29
    %s32 = sadd.s32 1, %s23
    %s33 = scalar_select %p30, %s32, %s23
    %p34 = scmp.ge.s32.totalorder %s33, 2
    %s35 = scalar_select %p34, 0, %s33
    %s36 = ssub.s32 %s23, %s35
    %s37 = ssub.s32 %s24, %s31
    %s38 = sor.u32 %s36, %s37
    %p39 = scmp.eq.s32.totalorder %s38, 0
    %s41 = sadd.s32 %s40, 1
    %s42 = scalar_select %p39, %s40, %s41
    %p45 = pneg %p39
    %p46 = scmp.eq.s32.totalorder %s16, 1
    %p47 = por %p45, %p46
    %p48 = scmp.ne.s32.totalorder %s40, %s43
    %p49 = scmp.eq.s32.totalorder %s16, 0
    %p50 = por %p48, %p49
    %p51 = scmp.ne.s32.totalorder %s40, %s43
    %p52 = scmp.eq.s32.totalorder %s21, 1
    %p53 = por %p51, %p52
    %p54 = scmp.ne.s32.totalorder %s43, %s44
    %p55 = scmp.eq.s32.totalorder %s21, 0
    %p56 = por %p54, %p55
    %p57 = scmp.ne.s32.totalorder %s43, %s44
    %p58 = scmp.eq.s32.totalorder %s22, 1
    %p59 = por %p57, %p58
    %p61 = scmp.ne.s32.totalorder %s44, %s60
    %p62 = scmp.eq.s32.totalorder %s22, 0
    %p63 = por %p61, %p62
    %s64 = ssub.s32 %s23, %s35
    %s65 = ssub.s32 %s24, %s31
    %s66 = sor.u32 %s64, %s65
    %p67 = scmp.eq.s32.totalorder %s66, 0
    %s69 = sadd.s32 %s68, 1
    %s70 = scalar_select %p67, %s68, %s69
    %p73 = pneg %p67
    %p74 = scmp.eq.s32.totalorder %s16, 1
    %p75 = por %p73, %p74
    %p76 = scmp.ne.s32.totalorder %s68, %s71
    %p77 = scmp.eq.s32.totalorder %s16, 0
    %p78 = por %p76, %p77
    %p79 = scmp.ne.s32.totalorder %s68, %s71
    %p80 = scmp.eq.s32.totalorder %s21, 1
    %p81 = por %p79, %p80
    %p82 = scmp.ne.s32.totalorder %s71, %s72
    %p83 = scmp.eq.s32.totalorder %s21, 0
    %p84 = por %p82, %p83
    %p85 = scmp.ne.s32.totalorder %s71, %s72
    %p86 = scmp.eq.s32.totalorder %s22, 1
    %p87 = por %p85, %p86
    %p89 = scmp.ne.s32.totalorder %s72, %s88
    %p90 = scmp.eq.s32.totalorder %s22, 0
    %p91 = por %p89, %p90
    %s93 = sadd.s32 %s92, 1
    %p96 = scmp.eq.s32.totalorder %s16, 1
    %p97 = scmp.ne.s32.totalorder %s92, %s94
    %p98 = scmp.eq.s32.totalorder %s16, 0
    %p99 = por %p97, %p98
    %p100 = scmp.ne.s32.totalorder %s92, %s94
    %p101 = scmp.eq.s32.totalorder %s21, 1
    %p102 = por %p100, %p101
    %p103 = scmp.ne.s32.totalorder %s94, %s95
    %p104 = scmp.eq.s32.totalorder %s21, 0
    %p105 = por %p103, %p104
    %p106 = scmp.ne.s32.totalorder %s94, %s95
    %p107 = scmp.eq.s32.totalorder %s22, 1
    %p108 = por %p106, %p107
    %p110 = scmp.ne.s32.totalorder %s95, %s109
    %p111 = scmp.eq.s32.totalorder %s22, 0
    %p112 = por %p110, %p111
    %s114 = sadd.s32 %s113, 1
    %p117 = scmp.eq.s32.totalorder %s16, 1
    %p118 = scmp.ne.s32.totalorder %s113, %s115
    %p119 = scmp.eq.s32.totalorder %s16, 0
    %p120 = por %p118, %p119
    %p121 = scmp.ne.s32.totalorder %s113, %s115
    %p122 = scmp.eq.s32.totalorder %s21, 1
    %p123 = por %p121, %p122
    %p124 = scmp.ne.s32.totalorder %s115, %s116
    %p125 = scmp.eq.s32.totalorder %s21, 0
    %p126 = por %p124, %p125
    %p127 = scmp.ne.s32.totalorder %s115, %s116
    %p128 = scmp.eq.s32.totalorder %s22, 1
    %p129 = por %p127, %p128
    %p131 = scmp.ne.s32.totalorder %s116, %s130
    %p132 = scmp.eq.s32.totalorder %s22, 0
    %p133 = por %p131, %p132
    %s135 = sadd.s32 %s134, 1
    %p138 = scmp.eq.s32.totalorder %s16, 1
    %p139 = scmp.ne.s32.totalorder %s134, %s136
    %p140 = scmp.eq.s32.totalorder %s16, 0
    %p141 = por %p139, %p140
    %p142 = scmp.ne.s32.totalorder %s134, %s136
    %p143 = scmp.eq.s32.totalorder %s21, 1
    %p144 = por %p142, %p143
    %p145 = scmp.ne.s32.totalorder %s136, %s137
    %p146 = scmp.eq.s32.totalorder %s21, 0
    %p147 = por %p145, %p146
    %p148 = scmp.ne.s32.totalorder %s136, %s137
    %p149 = scmp.eq.s32.totalorder %s22, 1
    %p150 = por %p148, %p149
    %p152 = scmp.ne.s32.totalorder %s137, %s151
    %p153 = scmp.eq.s32.totalorder %s22, 0
    %p154 = por %p152, %p153
    %s156 = sadd.s32 %s155, 1
    %p159 = scmp.eq.s32.totalorder %s16, 1
    %p160 = scmp.ne.s32.totalorder %s155, %s157
    %p161 = scmp.eq.s32.totalorder %s16, 0
    %p162 = por %p160, %p161
    %p163 = scmp.ne.s32.totalorder %s155, %s157
    %p164 = scmp.eq.s32.totalorder %s21, 1
    %p165 = por %p163, %p164
    %p166 = scmp.ne.s32.totalorder %s157, %s158
    %p167 = scmp.eq.s32.totalorder %s21, 0
    %p168 = por %p166, %p167
    %p169 = scmp.ne.s32.totalorder %s157, %s158
    %p170 = scmp.eq.s32.totalorder %s22, 1
    %p171 = por %p169, %p170
    %p173 = scmp.ne.s32.totalorder %s158, %s172
    %p174 = scmp.eq.s32.totalorder %s22, 0
    %p175 = por %p173, %p174
    %s176 = ssub.s32 %s23, %s35
    %s177 = ssub.s32 %s24, %s31
    %s178 = sor.u32 %s176, %s177
    %p179 = scmp.eq.s32.totalorder %s178, 0
    %s181 = sadd.s32 %s180, 1
    %s182 = scalar_select %p179, %s180, %s181
    %p185 = pneg %p179
    %p186 = scmp.eq.s32.totalorder %s16, 1
    %p187 = por %p185, %p186
    %p188 = scmp.ne.s32.totalorder %s180, %s183
    %p189 = scmp.eq.s32.totalorder %s16, 0
    %p190 = por %p188, %p189
    %p191 = scmp.ne.s32.totalorder %s180, %s183
    %p192 = scmp.eq.s32.totalorder %s21, 1
    %p193 = por %p191, %p192
    %p194 = scmp.ne.s32.totalorder %s183, %s184
    %p195 = scmp.eq.s32.totalorder %s21, 0
    %p196 = por %p194, %p195
    %p197 = scmp.ne.s32.totalorder %s183, %s184
    %p198 = scmp.eq.s32.totalorder %s22, 1
    %p199 = por %p197, %p198
    %p201 = scmp.ne.s32.totalorder %s184, %s200
    %p202 = scmp.eq.s32.totalorder %s22, 0
    %p203 = por %p201, %p202
    %s204 = ssub.s32 %s23, %s35
    %s205 = ssub.s32 %s24, %s31
    %s206 = sor.u32 %s204, %s205
    %p207 = scmp.eq.s32.totalorder %s206, 0
    %s209 = sadd.s32 %s208, 1
    %s210 = scalar_select %p207, %s208, %s209
    %p213 = pneg %p207
    %p214 = scmp.eq.s32.totalorder %s16, 1
    %p215 = por %p213, %p214
    %p216 = scmp.ne.s32.totalorder %s208, %s211
    %p217 = scmp.eq.s32.totalorder %s16, 0
    %p218 = por %p216, %p217
    %p219 = scmp.ne.s32.totalorder %s208, %s211
    %p220 = scmp.eq.s32.totalorder %s21, 1
    %p221 = por %p219, %p220
    %p222 = scmp.ne.s32.totalorder %s211, %s212
    %p223 = scmp.eq.s32.totalorder %s21, 0
    %p224 = por %p222, %p223
    %p225 = scmp.ne.s32.totalorder %s211, %s212
    %p226 = scmp.eq.s32.totalorder %s22, 1
    %p227 = por %p225, %p226
    %p229 = scmp.ne.s32.totalorder %s212, %s228
    %p230 = scmp.eq.s32.totalorder %s22, 0
    %p231 = por %p229, %p230
    %s232 = ssub.s32 %s23, %s35
    %p233 = scmp.eq.s32.totalorder %s232, 0
    %s235 = sadd.s32 %s234, 1
    %s236 = scalar_select %p233, %s234, %s235
    %p239 = pneg %p233
    %p240 = scmp.eq.s32.totalorder %s16, 1
    %p241 = por %p239, %p240
    %p242 = scmp.ne.s32.totalorder %s234, %s237
    %p243 = scmp.eq.s32.totalorder %s16, 0
    %p244 = por %p242, %p243
    %p245 = scmp.ne.s32.totalorder %s234, %s237
    %p246 = scmp.eq.s32.totalorder %s21, 1
    %p247 = por %p245, %p246
    %p248 = scmp.ne.s32.totalorder %s237, %s238
    %p249 = scmp.eq.s32.totalorder %s21, 0
    %p250 = por %p248, %p249
    %p251 = scmp.ne.s32.totalorder %s237, %s238
    %p252 = scmp.eq.s32.totalorder %s22, 1
    %p253 = por %p251, %p252
    %p255 = scmp.ne.s32.totalorder %s238, %s254
    %p256 = scmp.eq.s32.totalorder %s22, 0
    %p257 = por %p255, %p256
    %s258 = ssub.s32 %s23, %s35
    %p259 = scmp.eq.s32.totalorder %s258, 0
    %s261 = sadd.s32 %s260, 1
    %s262 = scalar_select %p259, %s260, %s261
    %p265 = pneg %p259
    %p266 = scmp.eq.s32.totalorder %s16, 1
    %p267 = por %p265, %p266
    %p268 = scmp.ne.s32.totalorder %s260, %s263
    %p269 = scmp.eq.s32.totalorder %s16, 0
    %p270 = por %p268, %p269
    %p271 = scmp.ne.s32.totalorder %s260, %s263
    %p272 = scmp.eq.s32.totalorder %s21, 1
    %p273 = por %p271, %p272
    %p274 = scmp.ne.s32.totalorder %s263, %s264
    %p275 = scmp.eq.s32.totalorder %s21, 0
    %p276 = por %p274, %p275
    %p277 = scmp.ne.s32.totalorder %s263, %s264
    %p278 = scmp.eq.s32.totalorder %s22, 1
    %p279 = por %p277, %p278
    %p281 = scmp.ne.s32.totalorder %s264, %s280
    %p282 = scmp.eq.s32.totalorder %s22, 0
    %p283 = por %p281, %p282
    %p284 = scmp.le.s32.totalorder 1, %s16
    %p285 = scmp.lt.s32.totalorder %s16, 3
    %p286 = pnand %p284, %p285
    %p287 = pneg %p286
    // Predicated region
    $region9: #{_aft_forward.2} parent=5 // pred_check
      _
    $region10: #{_aft_forward.2} parent=5 // pred_check_branch
      %289 = sbr.rel (%p286) target = $region12
    $region11: #{_aft_forward.2} parent=5 // pred_region
      %s290 = ssub.s32 %s16, 1
      // Predicated region
      $region13: #{_aft_forward.2} parent=11 // pred_check
        %p291 = pneg %p105
      $region14: #{_aft_forward.2} parent=11 // pred_check_branch
        %293 = sbr.rel (%p291) target = $region16
      $region15: #{_aft_forward.2} parent=11 // pred_region
        _
      $region16: #{_aft_forward.2} parent=11 // pred_fallthru
        _
      // Predicated region
      $region17: #{_aft_forward.2} parent=11 // pred_check
        %p294 = pneg %p126
      $region18: #{_aft_forward.2} parent=11 // pred_check_branch
        %296 = sbr.rel (%p294) target = $region20
      $region19: #{_aft_forward.2} parent=11 // pred_region
        _
      $region20: #{_aft_forward.2} parent=11 // pred_fallthru
        _
      // Predicated region
      $region21: #{_aft_forward.2} parent=11 // pred_check
        %p297 = pneg %p147
      $region22: #{_aft_forward.2} parent=11 // pred_check_branch
        %299 = sbr.rel (%p297) target = $region24
      $region23: #{_aft_forward.2} parent=11 // pred_region
        _
      $region24: #{_aft_forward.2} parent=11 // pred_fallthru
        _
      // Predicated region
      $region25: #{_aft_forward.2} parent=11 // pred_check
        %p300 = pneg %p168
      $region26: #{_aft_forward.2} parent=11 // pred_check_branch
        %302 = sbr.rel (%p300) target = $region28
      $region27: #{_aft_forward.2} parent=11 // pred_region
        _
      $region28: #{_aft_forward.2} parent=11 // pred_fallthru
        _
    $region12: #{_aft_forward.2} parent=5 // pred_fallthru
      _
    %p303 = scmp.lt.s32.totalorder %s16, 2
    // Predicated region
    $region29: #{_aft_forward.2} parent=5 // pred_check
      %p304 = pneg %p303
    $region30: #{_aft_forward.2} parent=5 // pred_check_branch
      %306 = sbr.rel (%p304) target = $region32
    $region31: #{_aft_forward.2} parent=5 // pred_region
      // Predicated region
      $region33: #{_aft_forward.2} parent=31 // pred_check
        %p307 = pneg %p50
      $region34: #{_aft_forward.2} parent=31 // pred_check_branch
        %309 = sbr.rel (%p307) target = $region36
      $region35: #{_aft_forward.2} parent=31 // pred_region
        %s310 = smul.u32 2, %s24
        %p311 = scmp.lt.s32.totalorder %s23, 1
        %s312 = scalar_select %p311, %s23, 1
        %p313 = scmp.lt.s32.totalorder %s310, 1
        %s314 = scalar_select %p313, %s310, 1
        %s315 = smul.addr %s312, 2
        %s316 = sadd.s32 %s314, %s315
        %s317 = smul.addr %s316, 4
        %s318 = scalar_lea.vmem %s0, %s317
        %s319 = smul.u32 2, %s24
      $region36: #{_aft_forward.2} parent=31 // pred_fallthru
        _
      // Predicated region
      $region37: #{_aft_forward.2} parent=31 // pred_check
        %p320 = pneg %p78
      $region38: #{_aft_forward.2} parent=31 // pred_check_branch
        %322 = sbr.rel (%p320) target = $region40
      $region39: #{_aft_forward.2} parent=31 // pred_region
        %s323 = smul.u32 2, %s24
        %p324 = scmp.lt.s32.totalorder %s23, 1
        %s325 = scalar_select %p324, %s23, 1
        %p326 = scmp.lt.s32.totalorder %s323, 1
        %s327 = scalar_select %p326, %s323, 1
        %s328 = smul.addr %s325, 2
        %s329 = sadd.s32 %s327, %s328
        %s330 = smul.addr %s329, 4
        %s331 = scalar_lea.vmem %s1, %s330
        %s332 = smul.u32 2, %s24
      $region40: #{_aft_forward.2} parent=31 // pred_fallthru
        _
    $region32: #{_aft_forward.2} parent=5 // pred_fallthru
      _
    %p333 = scmp.le.s32.totalorder 1, %s16
    %p334 = scmp.lt.s32.totalorder %s16, 3
    %p335 = pnand %p333, %p334
    %p336 = pneg %p335
    // Predicated region
    $region41: #{_aft_forward.2} parent=5 // pred_check
      _
    $region42: #{_aft_forward.2} parent=5 // pred_check_branch
      %338 = sbr.rel (%p335) target = $region44
    $region43: #{_aft_forward.2} parent=5 // pred_region
      %s339 = ssub.s32 %s16, 1
      %s340 = smul.u32 2, %s26
      %p341 = scmp.lt.s32.totalorder %s25, 1
      %s342 = scalar_select %p341, %s25, 1
      %p343 = scmp.lt.s32.totalorder %s340, 1
      %s344 = scalar_select %p343, %s340, 1
      %s345 = smul.addr %s342, 2
      %s346 = sadd.s32 %s344, %s345
      %s347 = smul.addr %s346, 4
      %s348 = scalar_lea.vmem %s0, %s347
      %p349 = pneg %p56
      %p350 = pneg %p53
      %s351 = smul.u32 2, %s26
      %p352 = scmp.lt.s32.totalorder %s25, 1
      %s353 = scalar_select %p352, %s25, 1
      %p354 = scmp.lt.s32.totalorder %s351, 1
      %s355 = scalar_select %p354, %s351, 1
      %s356 = smul.addr %s353, 2
      %s357 = sadd.s32 %s355, %s356
      %s358 = smul.addr %s357, 4
      %s359 = scalar_lea.vmem %s1, %s358
      %p360 = pneg %p84
      %p361 = pneg %p81
      %p362 = pneg %p105
      %p363 = pneg %p102
      %p364 = pneg %p126
      %p365 = pneg %p123
      %p366 = pneg %p147
      %p367 = pneg %p144
      %p368 = pneg %p168
      %p369 = pneg %p165
      %p370 = pneg %p196
      %p371 = pneg %p193
      %s372 = smul.u32 2, %s26
      %p373 = scmp.lt.s32.totalorder %s25, 1
      %s374 = scalar_select %p373, %s25, 1
      %p375 = scmp.lt.s32.totalorder %s372, 1
      %s376 = scalar_select %p375, %s372, 1
      %s377 = smul.addr %s374, 2
      %s378 = sadd.s32 %s376, %s377
      %s379 = smul.addr %s378, 4
      %s380 = scalar_lea.vmem %s6, %s379
      %p381 = pneg %p224
      %p382 = pneg %p221
      %s383 = smul.u32 2, %s26
      %p384 = scmp.lt.s32.totalorder %s25, 1
      %s385 = scalar_select %p384, %s25, 1
      %p386 = scmp.lt.s32.totalorder %s383, 1
      %s387 = scalar_select %p386, %s383, 1
      %s388 = smul.addr %s385, 2
      %s389 = sadd.s32 %s387, %s388
      %s390 = smul.addr %s389, 4
      %s391 = scalar_lea.vmem %s7, %s390
      %p392 = pneg %p250
      %p393 = pneg %p247
      %p394 = scmp.lt.s32.totalorder %s25, 1
      %s395 = scalar_select %p394, %s25, 1
      %s396 = scalar_lea.vmem %s8, %s395
      %p397 = pneg %p276
      %p398 = pneg %p273
      %p399 = scmp.lt.s32.totalorder %s25, 1
      %s400 = scalar_select %p399, %s25, 1
      %s401 = scalar_lea.vmem %s9, %s400
      %s402 = smul.u32 2, %s26
      %p403 = scmp.lt.s32.totalorder %s25, 1
      %s404 = scalar_select %p403, %s25, 1
      %p405 = scmp.lt.s32.totalorder %s402, 1
      %s406 = scalar_select %p405, %s402, 1
      %s407 = smul.addr %s404, 2
      %s408 = sadd.s32 %s406, %s407
      %s409 = smul.addr %s408, 4
      %s410 = scalar_lea.vmem %s0, %s409
      %s411 = smul.u32 2, %s26
      %s412 = smul.u32 2, %s26
      %p413 = scmp.lt.s32.totalorder %s25, 1
      %s414 = scalar_select %p413, %s25, 1
      %p415 = scmp.lt.s32.totalorder %s412, 1
      %s416 = scalar_select %p415, %s412, 1
      %s417 = smul.addr %s414, 2
      %s418 = sadd.s32 %s416, %s417
      %s419 = smul.addr %s418, 4
      %s420 = scalar_lea.vmem %s1, %s419
      %s421 = smul.u32 2, %s26
      %s422 = smul.u32 2, %s26
      %p423 = scmp.lt.s32.totalorder %s25, 1
      %s424 = scalar_select %p423, %s25, 1
      %p425 = scmp.lt.s32.totalorder %s422, 1
      %s426 = scalar_select %p425, %s422, 1
      %s427 = smul.addr %s424, 2
      %s428 = sadd.s32 %s426, %s427
      %s429 = smul.addr %s428, 4
      %s430 = scalar_lea.vmem %s6, %s429
      %s431 = smul.u32 2, %s26
      %s432 = smul.u32 2, %s26
      %p433 = scmp.lt.s32.totalorder %s25, 1
      %s434 = scalar_select %p433, %s25, 1
      %p435 = scmp.lt.s32.totalorder %s432, 1
      %s436 = scalar_select %p435, %s432, 1
      %s437 = smul.addr %s434, 2
      %s438 = sadd.s32 %s436, %s437
      %s439 = smul.addr %s438, 4
      %s440 = scalar_lea.vmem %s7, %s439
      %s441 = smul.u32 2, %s26
      %p442 = scmp.lt.s32.totalorder %s25, 1
      %s443 = scalar_select %p442, %s25, 1
      %s444 = scalar_lea.vmem %s8, %s443
      %p445 = scmp.lt.s32.totalorder %s25, 1
      %s446 = scalar_select %p445, %s25, 1
      %s447 = scalar_lea.vmem %s9, %s446
      %v448 = vld [vmem:[%s410] sm:$0xf]
      %v449 = vld [vmem:[%s410 + $0x4] sm:$0xf]
      %v450 = vld [vmem:[%s2] sm:$0xf]
      %v451 = vld [vmem:[%s2 + $0x4] sm:$0xf]
      %v452 = vld [vmem:[%s2 + $0x8] sm:$0xf]
      %v453 = vld [vmem:[%s2 + $0xc] sm:$0xf]
      %v454 = vld [vmem:[%s2 + $0x10] sm:$0xf]
      %v455 = vld [vmem:[%s2 + $0x14] sm:$0xf]
      %v456 = vld [vmem:[%s2 + $0x18] sm:$0xf]
      %v457 = vld [vmem:[%s2 + $0x1c] sm:$0xf]
      %v458 = vld [vmem:[%s2 + $0x20] sm:$0xf]
      %v459 = vld [vmem:[%s2 + $0x24] sm:$0xf]
      %v460 = vld [vmem:[%s2 + $0x28] sm:$0xf]
      %v461 = vld [vmem:[%s2 + $0x2c] sm:$0xf]
      %v462 = vld [vmem:[%s2 + $0x30] sm:$0xf]
      %v463 = vld [vmem:[%s2 + $0x34] sm:$0xf]
      %v464 = vld [vmem:[%s2 + $0x38] sm:$0xf]
      %v465 = vld [vmem:[%s2 + $0x3c] sm:$0xf]
      %v466 = vld [vmem:[%s3] sm:$0x1]
      %v468 = vperm.slane %v466, 0
      %v472 = vunpack.c.l.b16 %v448
      %v473 = vunpack.c.l.b16 %v449
      %v474 = vpack.c.b16 %v473, %v472
      %v492 = vunpack.c.l.b16 %v450
      %v493 = vunpack.c.l.b16 %v451
      %v494 = vunpack.c.l.b16 %v452
      %v495 = vunpack.c.l.b16 %v453
      %v496 = vunpack.c.l.b16 %v454
      %v497 = vunpack.c.l.b16 %v455
      %v498 = vunpack.c.l.b16 %v456
      %v499 = vunpack.c.l.b16 %v457
      %v500 = vunpack.c.l.b16 %v458
      %v501 = vunpack.c.l.b16 %v459
      %v502 = vunpack.c.l.b16 %v460
      %v503 = vunpack.c.l.b16 %v461
      %v504 = vunpack.c.l.b16 %v462
      %v505 = vunpack.c.l.b16 %v463
      %v506 = vunpack.c.l.b16 %v464
      %v507 = vunpack.c.l.b16 %v465
      %v508 = vpack.c.b16 %v493, %v492
      %v509 = vpack.c.b16 %v495, %v494
      %v510 = vpack.c.b16 %v497, %v496
      %v511 = vpack.c.b16 %v499, %v498
      %v512 = vpack.c.b16 %v501, %v500
      %v513 = vpack.c.b16 %v503, %v502
      %v514 = vpack.c.b16 %v505, %v504
      %v515 = vpack.c.b16 %v507, %v506
      %524 = vmatpush.bf16.msra.mxu0 %v515
      %525 = vmatpush.bf16.msra.mxu0 %v514
      %526 = vmatpush.bf16.msra.mxu0 %v513
      %527 = vmatpush.bf16.msra.mxu0 %v512
      %528 = vmatpush.bf16.msra.mxu0 %v511
      %529 = vmatpush.bf16.msra.mxu0 %v510
      %530 = vmatpush.bf16.msra.mxu0 %v509
      %531 = vmatpush.bf16.msra.mxu0 %v508
      %532 = vmatmul.bf16.gmra.mxu0 %v474
      %v533 = vpop.f32.mrf.mxu0
      %v534 = vadd.f32 %v468, %v533
      %v535 = vpop.f32.mrf.mxu0
      %v536 = vadd.f32 %v468, %v535
      %537 = vdwg.mxu0
      %v538 = vld [vmem:[%s420] sm:$0xf]
      %v539 = vld [vmem:[%s420 + $0x4] sm:$0xf]
      %v540 = vld [vmem:[%s4] sm:$0xf]
      %v541 = vld [vmem:[%s4 + $0x4] sm:$0xf]
      %v542 = vld [vmem:[%s4 + $0x8] sm:$0xf]
      %v543 = vld [vmem:[%s4 + $0xc] sm:$0xf]
      %v544 = vld [vmem:[%s4 + $0x10] sm:$0xf]
      %v545 = vld [vmem:[%s4 + $0x14] sm:$0xf]
      %v546 = vld [vmem:[%s4 + $0x18] sm:$0xf]
      %v547 = vld [vmem:[%s4 + $0x1c] sm:$0xf]
      %v548 = vld [vmem:[%s4 + $0x20] sm:$0xf]
      %v549 = vld [vmem:[%s4 + $0x24] sm:$0xf]
      %v550 = vld [vmem:[%s4 + $0x28] sm:$0xf]
      %v551 = vld [vmem:[%s4 + $0x2c] sm:$0xf]
      %v552 = vld [vmem:[%s4 + $0x30] sm:$0xf]
      %v553 = vld [vmem:[%s4 + $0x34] sm:$0xf]
      %v554 = vld [vmem:[%s4 + $0x38] sm:$0xf]
      %v555 = vld [vmem:[%s4 + $0x3c] sm:$0xf]
      %v556 = vld [vmem:[%s5] sm:$0x1]
      %v558 = vperm.slane %v556, 0
      %v562 = vunpack.c.l.b16 %v538
      %v563 = vunpack.c.l.b16 %v539
      %v564 = vpack.c.b16 %v563, %v562
      %v582 = vunpack.c.l.b16 %v540
      %v583 = vunpack.c.l.b16 %v541
      %v584 = vunpack.c.l.b16 %v542
      %v585 = vunpack.c.l.b16 %v543
      %v586 = vunpack.c.l.b16 %v544
      %v587 = vunpack.c.l.b16 %v545
      %v588 = vunpack.c.l.b16 %v546
      %v589 = vunpack.c.l.b16 %v547
      %v590 = vunpack.c.l.b16 %v548
      %v591 = vunpack.c.l.b16 %v549
      %v592 = vunpack.c.l.b16 %v550
      %v593 = vunpack.c.l.b16 %v551
      %v594 = vunpack.c.l.b16 %v552
      %v595 = vunpack.c.l.b16 %v553
      %v596 = vunpack.c.l.b16 %v554
      %v597 = vunpack.c.l.b16 %v555
      %v598 = vpack.c.b16 %v583, %v582
      %v599 = vpack.c.b16 %v585, %v584
      %v600 = vpack.c.b16 %v587, %v586
      %v601 = vpack.c.b16 %v589, %v588
      %v602 = vpack.c.b16 %v591, %v590
      %v603 = vpack.c.b16 %v593, %v592
      %v604 = vpack.c.b16 %v595, %v594
      %v605 = vpack.c.b16 %v597, %v596
      %614 = vmatpush.bf16.msra.mxu0 %v605
      %615 = vmatpush.bf16.msra.mxu0 %v604
      %616 = vmatpush.bf16.msra.mxu0 %v603
      %617 = vmatpush.bf16.msra.mxu0 %v602
      %618 = vmatpush.bf16.msra.mxu0 %v601
      %619 = vmatpush.bf16.msra.mxu0 %v600
      %620 = vmatpush.bf16.msra.mxu0 %v599
      %621 = vmatpush.bf16.msra.mxu0 %v598
      %622 = vmatmul.bf16.gmra.mxu0 %v564
      %v623 = vpop.f32.mrf.mxu0
      %v624 = vadd.f32 %v558, %v623
      %v625 = vpop.f32.mrf.mxu0
      %v626 = vadd.f32 %v558, %v625
      %627 = vdwg.mxu0
      %v628 = vmul.f32 %v534, 1.442695
      %v629 = vpow.pop %v628
      %v630 = vmul.f32 %v536, 1.442695
      %v631 = vpow.pop %v630
      %s632 = smul.u32 %s26, 16
      %v633 = vlaneseq
      %v634 = vshrl.u32 %v633, 7
      %v635 = vadd.s32 %v634, 8
      %v636 = vstv %s632
      %v637 = vadd.s32 %v636, %v634
      %v638 = vadd.s32 %v636, %v635
      %vm639 = vcmp.lt.s32.totalorder %v637, 8
      %vm640 = vcmp.lt.s32.totalorder %v638, 8
      %v641 = vsel %vm639, %v629, 0.0
      %v642 = vsel %vm640, %v631, 0.0
      %v643 = vmul.f32 %v641, %v624
      %v644 = vmul.f32 %v642, %v626
      %v645 = vpack.c.bf16 %v641, %v641
      %v646 = vpack.c.bf16 %v642, %v642
      %647 = vst [vmem:[%s430] sm:$0xf] %v645
      %648 = vst [vmem:[%s430 + $0x4] sm:$0xf] %v646
      %v649 = vpack.c.bf16 %v643, %v643
      %v650 = vpack.c.bf16 %v644, %v644
      %651 = vst [vmem:[%s440] sm:$0xf] %v649
      %652 = vst [vmem:[%s440 + $0x4] sm:$0xf] %v650
      %p653 = scmp.eq.s32.totalorder %s26, 0
      // Predicated region
      $region45: #{_aft_forward.2} parent=43 // pred_check
        %p654 = pneg %p653
      $region46: #{_aft_forward.2} parent=43 // pred_check_branch
        %656 = sbr.rel (%p654) target = $region48
      $region47: #{_aft_forward.2} parent=43 // pred_region
        %657 = vst [vmem:[%s444] sm:$0x1] 0.0
        %658 = vst [vmem:[%s447] sm:$0x1] 0.0
      $region48: #{_aft_forward.2} parent=43 // pred_fallthru
        _
      %v659 = vld [vmem:[%s444] sm:$0x1]
      %v660 = vadd.f32 %v641, %v642
      %v661 = vrot.slane %v660, 4
      %v662 = vadd.f32 %v660, %v661
      %v663 = vrot.slane %v662, 2
      %v664 = vadd.f32 %v662, %v663
      %v665 = vrot.slane %v664, 1
      %v666 = vadd.f32 %v664, %v665
      %v667 = vadd.f32 %v659, %v666
      %668 = vst [vmem:[%s444] sm:$0x1] %v667
      %v669 = vld [vmem:[%s447] sm:$0x1]
      %v670 = vadd.f32 %v643, %v644
      %v671 = vrot.slane %v670, 4
      %v672 = vadd.f32 %v670, %v671
      %v673 = vrot.slane %v672, 2
      %v674 = vadd.f32 %v672, %v673
      %v675 = vrot.slane %v674, 1
      %v676 = vadd.f32 %v674, %v675
      %v677 = vadd.f32 %v669, %v676
      %678 = vst [vmem:[%s447] sm:$0x1] %v677
      %s679 = smul.u32 2, %s26
      %p680 = scmp.lt.s32.totalorder %s25, 1
      %s681 = scalar_select %p680, %s25, 1
      %p682 = scmp.lt.s32.totalorder %s679, 1
      %s683 = scalar_select %p682, %s679, 1
      %s684 = smul.addr %s681, 2
      %s685 = sadd.s32 %s683, %s684
      %s686 = smul.addr %s685, 4
      %s687 = scalar_lea.vmem %s6, %s686
      %s688 = smul.u32 2, %s26
      %p689 = scmp.lt.s32.totalorder %s25, 1
      %s690 = scalar_select %p689, %s25, 1
      %p691 = scmp.lt.s32.totalorder %s688, 1
      %s692 = scalar_select %p691, %s688, 1
      %s693 = smul.addr %s690, 2
      %s694 = sadd.s32 %s692, %s693
      %s695 = smul.addr %s694, 4
      %s696 = scalar_lea.vmem %s7, %s695
      %p697 = scmp.lt.s32.totalorder %s25, 1
      %s698 = scalar_select %p697, %s25, 1
      %s699 = scalar_lea.vmem %s8, %s698
      %p700 = scmp.lt.s32.totalorder %s25, 1
      %s701 = scalar_select %p700, %s25, 1
      %s702 = scalar_lea.vmem %s9, %s701
      // Predicated region
      $region49: #{_aft_forward.2} parent=43 // pred_check
        %p703 = pneg %p193
      $region50: #{_aft_forward.2} parent=43 // pred_check_branch
        %705 = sbr.rel (%p703) target = $region52
      $region51: #{_aft_forward.2} parent=43 // pred_region
        %s706 = smul.u32 2, %s26
      $region52: #{_aft_forward.2} parent=43 // pred_fallthru
        _
      // Predicated region
      $region53: #{_aft_forward.2} parent=43 // pred_check
        %p707 = pneg %p221
      $region54: #{_aft_forward.2} parent=43 // pred_check_branch
        %709 = sbr.rel (%p707) target = $region56
      $region55: #{_aft_forward.2} parent=43 // pred_region
        %s710 = smul.u32 2, %s26
      $region56: #{_aft_forward.2} parent=43 // pred_fallthru
        _
      // Predicated region
      $region57: #{_aft_forward.2} parent=43 // pred_check
        %p711 = pneg %p247
      $region58: #{_aft_forward.2} parent=43 // pred_check_branch
        %713 = sbr.rel (%p711) target = $region60
      $region59: #{_aft_forward.2} parent=43 // pred_region
        _
      $region60: #{_aft_forward.2} parent=43 // pred_fallthru
        _
      // Predicated region
      $region61: #{_aft_forward.2} parent=43 // pred_check
        %p714 = pneg %p273
      $region62: #{_aft_forward.2} parent=43 // pred_check_branch
        %716 = sbr.rel (%p714) target = $region64
      $region63: #{_aft_forward.2} parent=43 // pred_region
        _
      $region64: #{_aft_forward.2} parent=43 // pred_fallthru
        _
    $region44: #{_aft_forward.2} parent=5 // pred_fallthru
      _
    %p717 = scmp.le.s32.totalorder 2, %s16
    // Predicated region
    $region65: #{_aft_forward.2} parent=5 // pred_check
      %p718 = pneg %p717
    $region66: #{_aft_forward.2} parent=5 // pred_check_branch
      %720 = sbr.rel (%p718) target = $region68
    $region67: #{_aft_forward.2} parent=5 // pred_region
      %s721 = ssub.s32 %s16, 2
      // Predicated region
      $region69: #{_aft_forward.2} parent=67 // pred_check
        %p722 = pneg %p199
      $region70: #{_aft_forward.2} parent=67 // pred_check_branch
        %724 = sbr.rel (%p722) target = $region72
      $region71: #{_aft_forward.2} parent=67 // pred_region
        %s725 = smul.u32 2, %s28
        %p726 = scmp.lt.s32.totalorder %s27, 1
        %s727 = scalar_select %p726, %s27, 1
        %p728 = scmp.lt.s32.totalorder %s725, 1
        %s729 = scalar_select %p728, %s725, 1
        %s730 = smul.addr %s727, 2
        %s731 = sadd.s32 %s729, %s730
        %s732 = smul.addr %s731, 4
        %s733 = scalar_lea.vmem %s6, %s732
      $region72: #{_aft_forward.2} parent=67 // pred_fallthru
        _
      // Predicated region
      $region73: #{_aft_forward.2} parent=67 // pred_check
        %p734 = pneg %p227
      $region74: #{_aft_forward.2} parent=67 // pred_check_branch
        %736 = sbr.rel (%p734) target = $region76
      $region75: #{_aft_forward.2} parent=67 // pred_region
        %s737 = smul.u32 2, %s28
        %p738 = scmp.lt.s32.totalorder %s27, 1
        %s739 = scalar_select %p738, %s27, 1
        %p740 = scmp.lt.s32.totalorder %s737, 1
        %s741 = scalar_select %p740, %s737, 1
        %s742 = smul.addr %s739, 2
        %s743 = sadd.s32 %s741, %s742
        %s744 = smul.addr %s743, 4
        %s745 = scalar_lea.vmem %s7, %s744
      $region76: #{_aft_forward.2} parent=67 // pred_fallthru
        _
      // Predicated region
      $region77: #{_aft_forward.2} parent=67 // pred_check
        %p746 = pneg %p253
      $region78: #{_aft_forward.2} parent=67 // pred_check_branch
        %748 = sbr.rel (%p746) target = $region80
      $region79: #{_aft_forward.2} parent=67 // pred_region
        %p749 = scmp.lt.s32.totalorder %s27, 1
        %s750 = scalar_select %p749, %s27, 1
        %s751 = scalar_lea.vmem %s8, %s750
      $region80: #{_aft_forward.2} parent=67 // pred_fallthru
        _
      // Predicated region
      $region81: #{_aft_forward.2} parent=67 // pred_check
        %p752 = pneg %p279
      $region82: #{_aft_forward.2} parent=67 // pred_check_branch
        %754 = sbr.rel (%p752) target = $region84
      $region83: #{_aft_forward.2} parent=67 // pred_region
        %p755 = scmp.lt.s32.totalorder %s27, 1
        %s756 = scalar_select %p755, %s27, 1
        %s757 = scalar_lea.vmem %s9, %s756
      $region84: #{_aft_forward.2} parent=67 // pred_fallthru
        _
    $region68: #{_aft_forward.2} parent=5 // pred_fallthru
      _
  $region6: #{_aft_forward.2} parent=0 // loop_footer
    %s20 = sadd.s32 1, %s16
  $region7: #{_aft_forward.2} parent=0 // loop_footer_branch
    %15 = sbr.rel target = $region3
  $region8: #{_aft_forward.2} parent=0 // loop_exit
    _

// kernel: _aft_forward.3
$region0: #{_aft_forward.3}
  #allocation0 [shape = 'u32[]', space=smem, size = 0x4, offset = 0x4, fixed_abs, tag = 'smem constant byte address 0x4 - core index']
  #allocation1 [shape = 'u32[72,128]{1,0:T(1,128)}', space=vmem, size = 0x9000, scoped, tag = 'internal scratch']
  #allocation2 [shape = 'f32[16,128]{1,0:T(8,128)}', space=vmem, size = 0x2000, scoped, tag = 'scratch operand']
  #allocation3 [shape = 'f32[16,128]{1,0:T(8,128)}', space=vmem, size = 0x2000, scoped, tag = 'scratch operand']
  %s0 = inlined_call_operand.vmem [shape: bf16[2,16,128], index: 0, kind: input, shape index: {}]
  %s1 = inlined_call_operand.vmem [shape: bf16[128,128], index: 1, kind: input, shape index: {}]
  %s2 = inlined_call_operand.vmem [shape: f32[1,128], index: 2, kind: input, shape index: {}]
  %s3 = inlined_call_operand.vmem [shape: bf16[16,16], index: 3, kind: input, shape index: {}]
  %s4 = inlined_call_operand.vmem [shape: bf16[2,16,128], index: 4, kind: input, shape index: {}]
  %s5 = inlined_call_operand.vmem [shape: bf16[2,16,128], index: 5, kind: input, shape index: {}]
  %s6 = inlined_call_operand.vmem [shape: f32[2,1,128], index: 6, kind: input, shape index: {}]
  %s7 = inlined_call_operand.vmem [shape: f32[2,1,128], index: 7, kind: input, shape index: {}]
  %s8 = inlined_call_operand.vmem [shape: bf16[128,128], index: 8, kind: input, shape index: {}]
  %s9 = inlined_call_operand.vmem [shape: f32[1,128], index: 9, kind: input, shape index: {}]
  %s10 = inlined_call_operand.vmem [shape: f32[2,16,128], index: 10, kind: output, shape index: {0}]
  %s11 = inlined_call_operand.vmem [shape: bf16[2,16,128], index: 11, kind: output, shape index: {1}]
  %12 = xla_tuple %s10, %s11
  %s13 = sld [smem:[#allocation0]]
  $region93: #{_aft_forward.3} parent=0
    _
  %s15 = ssub.s32 1, %s13
  %s16 = scalar_select 0, %s15, %s13
  loop: start=0, step=1, limit=8
  $region2: #{_aft_forward.3} parent=0 // loop_pre_header
    _
  $region3: #{_aft_forward.3} parent=0 // loop_header
    %s18 = sphi 0, %s22
    %p19 = scmp.ge.s32.totalorder %s18, 8
    %s25 = sphi 0, %s44
    %s26 = sphi 0, %s40
    %s27 = sphi 0, %s36
    %s28 = sphi 0, %s25
    %s29 = sphi 0, %s26
    %s30 = sphi 0, %s27
    %s31 = sphi 0, %s28
    %s32 = sphi 0, %s29
    %s33 = sphi 0, %s30
    %s49 = sphi 0, %s51
    %s52 = sphi 0, %s49
    %s53 = sphi 0, %s52
    %s69 = sphi 0, %s53
    %s73 = sphi 0, %s73
    %s75 = sphi 0, %s73
    %s76 = sphi 0, %s75
    %s90 = sphi 0, %s76
    %s94 = sphi 0, %s94
    %s96 = sphi 0, %s94
    %s97 = sphi 0, %s96
    %s111 = sphi 0, %s97
    %s131 = sphi 0, %s133
    %s134 = sphi 0, %s131
    %s135 = sphi 0, %s134
    %s151 = sphi 0, %s135
    %s171 = sphi 0, %s173
    %s174 = sphi 0, %s171
    %s175 = sphi 0, %s174
    %s191 = sphi 0, %s175
    %s211 = sphi 0, %s213
    %s214 = sphi 0, %s211
    %s215 = sphi 0, %s214
    %s231 = sphi 0, %s215
    %s237 = sphi 0, %s239
    %s240 = sphi 0, %s237
    %s241 = sphi 0, %s240
    %s257 = sphi 0, %s241
    %s263 = sphi 0, %s265
    %s266 = sphi 0, %s263
    %s267 = sphi 0, %s266
    %s283 = sphi 0, %s267
    %s287 = sphi 0, %s287
    %s289 = sphi 0, %s287
    %s290 = sphi 0, %s289
    %s304 = sphi 0, %s290
    %s308 = sphi 0, %s308
    %s310 = sphi 0, %s308
    %s311 = sphi 0, %s310
    %s325 = sphi 0, %s311
    %s333 = sphi 0, %s335
    %s336 = sphi 0, %s333
    %s337 = sphi 0, %s336
    %s353 = sphi 0, %s337
    %s361 = sphi 0, %s363
    %s364 = sphi 0, %s361
    %s365 = sphi 0, %s364
    %s381 = sphi 0, %s365
  $region4: #{_aft_forward.3} parent=0 // loop_header_branch
    %21 = sbr.rel (%p19) target = $region8
  $region5: #{_aft_forward.3} parent=0 // loop_body
    %s23 = ssub.s32 %s18, 1
    %s24 = ssub.s32 %s18, 2
    %s34 = sadd.s32 1, %s27
    %p35 = scmp.ge.s32.totalorder %s34, 3
    %s36 = scalar_select %p35, 0, %s34
    %s37 = sadd.s32 1, %s26
    %s38 = scalar_select %p35, %s37, %s26
    %p39 = scmp.ge.s32.totalorder %s38, 1
    %s40 = scalar_select %p39, 0, %s38
    %s41 = sadd.s32 1, %s25
    %s42 = scalar_select %p39, %s41, %s25
    %p43 = scmp.ge.s32.totalorder %s42, 2
    %s44 = scalar_select %p43, 0, %s42
    %s45 = ssub.s32 %s25, %s44
    %s46 = ssub.s32 %s26, %s40
    %s47 = sor.u32 %s45, %s46
    %p48 = scmp.eq.s32.totalorder %s47, 0
    %s50 = sadd.s32 %s49, 1
    %s51 = scalar_select %p48, %s49, %s50
    %p54 = pneg %p48
    %p55 = scmp.eq.s32.totalorder %s18, 5
    %p56 = por %p54, %p55
    %p57 = scmp.ne.s32.totalorder %s49, %s52
    %p58 = scmp.eq.s32.totalorder %s18, 0
    %p59 = por %p57, %p58
    %p60 = scmp.ne.s32.totalorder %s49, %s52
    %p61 = scmp.eq.s32.totalorder %s23, 5
    %p62 = por %p60, %p61
    %p63 = scmp.ne.s32.totalorder %s52, %s53
    %p64 = scmp.eq.s32.totalorder %s23, 0
    %p65 = por %p63, %p64
    %p66 = scmp.ne.s32.totalorder %s52, %s53
    %p67 = scmp.eq.s32.totalorder %s24, 5
    %p68 = por %p66, %p67
    %p70 = scmp.ne.s32.totalorder %s53, %s69
    %p71 = scmp.eq.s32.totalorder %s24, 0
    %p72 = por %p70, %p71
    %s74 = sadd.s32 %s73, 1
    %p77 = scmp.eq.s32.totalorder %s18, 5
    %p78 = scmp.ne.s32.totalorder %s73, %s75
    %p79 = scmp.eq.s32.totalorder %s18, 0
    %p80 = por %p78, %p79
    %p81 = scmp.ne.s32.totalorder %s73, %s75
    %p82 = scmp.eq.s32.totalorder %s23, 5
    %p83 = por %p81, %p82
    %p84 = scmp.ne.s32.totalorder %s75, %s76
    %p85 = scmp.eq.s32.totalorder %s23, 0
    %p86 = por %p84, %p85
    %p87 = scmp.ne.s32.totalorder %s75, %s76
    %p88 = scmp.eq.s32.totalorder %s24, 5
    %p89 = por %p87, %p88
    %p91 = scmp.ne.s32.totalorder %s76, %s90
    %p92 = scmp.eq.s32.totalorder %s24, 0
    %p93 = por %p91, %p92
    %s95 = sadd.s32 %s94, 1
    %p98 = scmp.eq.s32.totalorder %s18, 5
    %p99 = scmp.ne.s32.totalorder %s94, %s96
    %p100 = scmp.eq.s32.totalorder %s18, 0
    %p101 = por %p99, %p100
    %p102 = scmp.ne.s32.totalorder %s94, %s96
    %p103 = scmp.eq.s32.totalorder %s23, 5
    %p104 = por %p102, %p103
    %p105 = scmp.ne.s32.totalorder %s96, %s97
    %p106 = scmp.eq.s32.totalorder %s23, 0
    %p107 = por %p105, %p106
    %p108 = scmp.ne.s32.totalorder %s96, %s97
    %p109 = scmp.eq.s32.totalorder %s24, 5
    %p110 = por %p108, %p109
    %p112 = scmp.ne.s32.totalorder %s97, %s111
    %p113 = scmp.eq.s32.totalorder %s24, 0
    %p114 = por %p112, %p113
    %s115 = sadd.s32 %s26, %s27
    %s116 = ssub.s32 %s115, 1
    %p117 = scmp.lt.s32.totalorder %s116, 0
    %s118 = scalar_select %p117, %s116, 0
    %p119 = scmp.gt.s32.totalorder %s118, 0
    %s120 = scalar_select %p119, %s118, 0
    %s121 = sadd.s32 %s40, %s36
    %s122 = ssub.s32 %s121, 1
    %p123 = scmp.lt.s32.totalorder %s122, 0
    %s124 = scalar_select %p123, %s122, 0
    %p125 = scmp.gt.s32.totalorder %s124, 0
    %s126 = scalar_select %p125, %s124, 0
    %s127 = ssub.s32 %s26, %s40
    %s128 = ssub.s32 %s120, %s126
    %s129 = sor.u32 %s127, %s128
    %p130 = scmp.eq.s32.totalorder %s129, 0
    %s132 = sadd.s32 %s131, 1
    %s133 = scalar_select %p130, %s131, %s132
    %p136 = pneg %p130
    %p137 = scmp.eq.s32.totalorder %s18, 5
    %p138 = por %p136, %p137
    %p139 = scmp.ne.s32.totalorder %s131, %s134
    %p140 = scmp.eq.s32.totalorder %s18, 0
    %p141 = por %p139, %p140
    %p142 = scmp.ne.s32.totalorder %s131, %s134
    %p143 = scmp.eq.s32.totalorder %s23, 5
    %p144 = por %p142, %p143
    %p145 = scmp.ne.s32.totalorder %s134, %s135
    %p146 = scmp.eq.s32.totalorder %s23, 0
    %p147 = por %p145, %p146
    %p148 = scmp.ne.s32.totalorder %s134, %s135
    %p149 = scmp.eq.s32.totalorder %s24, 5
    %p150 = por %p148, %p149
    %p152 = scmp.ne.s32.totalorder %s135, %s151
    %p153 = scmp.eq.s32.totalorder %s24, 0
    %p154 = por %p152, %p153
    %s155 = sadd.s32 %s26, %s27
    %s156 = ssub.s32 %s155, 1
    %p157 = scmp.lt.s32.totalorder %s156, 0
    %s158 = scalar_select %p157, %s156, 0
    %p159 = scmp.gt.s32.totalorder %s158, 0
    %s160 = scalar_select %p159, %s158, 0
    %s161 = sadd.s32 %s40, %s36
    %s162 = ssub.s32 %s161, 1
    %p163 = scmp.lt.s32.totalorder %s162, 0
    %s164 = scalar_select %p163, %s162, 0
    %p165 = scmp.gt.s32.totalorder %s164, 0
    %s166 = scalar_select %p165, %s164, 0
    %s167 = ssub.s32 %s25, %s44
    %s168 = ssub.s32 %s160, %s166
    %s169 = sor.u32 %s167, %s168
    %p170 = scmp.eq.s32.totalorder %s169, 0
    %s172 = sadd.s32 %s171, 1
    %s173 = scalar_select %p170, %s171, %s172
    %p176 = pneg %p170
    %p177 = scmp.eq.s32.totalorder %s18, 5
    %p178 = por %p176, %p177
    %p179 = scmp.ne.s32.totalorder %s171, %s174
    %p180 = scmp.eq.s32.totalorder %s18, 0
    %p181 = por %p179, %p180
    %p182 = scmp.ne.s32.totalorder %s171, %s174
    %p183 = scmp.eq.s32.totalorder %s23, 5
    %p184 = por %p182, %p183
    %p185 = scmp.ne.s32.totalorder %s174, %s175
    %p186 = scmp.eq.s32.totalorder %s23, 0
    %p187 = por %p185, %p186
    %p188 = scmp.ne.s32.totalorder %s174, %s175
    %p189 = scmp.eq.s32.totalorder %s24, 5
    %p190 = por %p188, %p189
    %p192 = scmp.ne.s32.totalorder %s175, %s191
    %p193 = scmp.eq.s32.totalorder %s24, 0
    %p194 = por %p192, %p193
    %s195 = sadd.s32 %s26, %s27
    %s196 = ssub.s32 %s195, 1
    %p197 = scmp.lt.s32.totalorder %s196, 0
    %s198 = scalar_select %p197, %s196, 0
    %p199 = scmp.gt.s32.totalorder %s198, 0
    %s200 = scalar_select %p199, %s198, 0
    %s201 = sadd.s32 %s40, %s36
    %s202 = ssub.s32 %s201, 1
    %p203 = scmp.lt.s32.totalorder %s202, 0
    %s204 = scalar_select %p203, %s202, 0
    %p205 = scmp.gt.s32.totalorder %s204, 0
    %s206 = scalar_select %p205, %s204, 0
    %s207 = ssub.s32 %s25, %s44
    %s208 = ssub.s32 %s200, %s206
    %s209 = sor.u32 %s207, %s208
    %p210 = scmp.eq.s32.totalorder %s209, 0
    %s212 = sadd.s32 %s211, 1
    %s213 = scalar_select %p210, %s211, %s212
    %p216 = pneg %p210
    %p217 = scmp.eq.s32.totalorder %s18, 5
    %p218 = por %p216, %p217
    %p219 = scmp.ne.s32.totalorder %s211, %s214
    %p220 = scmp.eq.s32.totalorder %s18, 0
    %p221 = por %p219, %p220
    %p222 = scmp.ne.s32.totalorder %s211, %s214
    %p223 = scmp.eq.s32.totalorder %s23, 5
    %p224 = por %p222, %p223
    %p225 = scmp.ne.s32.totalorder %s214, %s215
    %p226 = scmp.eq.s32.totalorder %s23, 0
    %p227 = por %p225, %p226
    %p228 = scmp.ne.s32.totalorder %s214, %s215
    %p229 = scmp.eq.s32.totalorder %s24, 5
    %p230 = por %p228, %p229
    %p232 = scmp.ne.s32.totalorder %s215, %s231
    %p233 = scmp.eq.s32.totalorder %s24, 0
    %p234 = por %p232, %p233
    %s235 = ssub.s32 %s25, %s44
    %p236 = scmp.eq.s32.totalorder %s235, 0
    %s238 = sadd.s32 %s237, 1
    %s239 = scalar_select %p236, %s237, %s238
    %p242 = pneg %p236
    %p243 = scmp.eq.s32.totalorder %s18, 5
    %p244 = por %p242, %p243
    %p245 = scmp.ne.s32.totalorder %s237, %s240
    %p246 = scmp.eq.s32.totalorder %s18, 0
    %p247 = por %p245, %p246
    %p248 = scmp.ne.s32.totalorder %s237, %s240
    %p249 = scmp.eq.s32.totalorder %s23, 5
    %p250 = por %p248, %p249
    %p251 = scmp.ne.s32.totalorder %s240, %s241
    %p252 = scmp.eq.s32.totalorder %s23, 0
    %p253 = por %p251, %p252
    %p254 = scmp.ne.s32.totalorder %s240, %s241
    %p255 = scmp.eq.s32.totalorder %s24, 5
    %p256 = por %p254, %p255
    %p258 = scmp.ne.s32.totalorder %s241, %s257
    %p259 = scmp.eq.s32.totalorder %s24, 0
    %p260 = por %p258, %p259
    %s261 = ssub.s32 %s25, %s44
    %p262 = scmp.eq.s32.totalorder %s261, 0
    %s264 = sadd.s32 %s263, 1
    %s265 = scalar_select %p262, %s263, %s264
    %p268 = pneg %p262
    %p269 = scmp.eq.s32.totalorder %s18, 5
    %p270 = por %p268, %p269
    %p271 = scmp.ne.s32.totalorder %s263, %s266
    %p272 = scmp.eq.s32.totalorder %s18, 0
    %p273 = por %p271, %p272
    %p274 = scmp.ne.s32.totalorder %s263, %s266
    %p275 = scmp.eq.s32.totalorder %s23, 5
    %p276 = por %p274, %p275
    %p277 = scmp.ne.s32.totalorder %s266, %s267
    %p278 = scmp.eq.s32.totalorder %s23, 0
    %p279 = por %p277, %p278
    %p280 = scmp.ne.s32.totalorder %s266, %s267
    %p281 = scmp.eq.s32.totalorder %s24, 5
    %p282 = por %p280, %p281
    %p284 = scmp.ne.s32.totalorder %s267, %s283
    %p285 = scmp.eq.s32.totalorder %s24, 0
    %p286 = por %p284, %p285
    %s288 = sadd.s32 %s287, 1
    %p291 = scmp.eq.s32.totalorder %s18, 5
    %p292 = scmp.ne.s32.totalorder %s287, %s289
    %p293 = scmp.eq.s32.totalorder %s18, 0
    %p294 = por %p292, %p293
    %p295 = scmp.ne.s32.totalorder %s287, %s289
    %p296 = scmp.eq.s32.totalorder %s23, 5
    %p297 = por %p295, %p296
    %p298 = scmp.ne.s32.totalorder %s289, %s290
    %p299 = scmp.eq.s32.totalorder %s23, 0
    %p300 = por %p298, %p299
    %p301 = scmp.ne.s32.totalorder %s289, %s290
    %p302 = scmp.eq.s32.totalorder %s24, 5
    %p303 = por %p301, %p302
    %p305 = scmp.ne.s32.totalorder %s290, %s304
    %p306 = scmp.eq.s32.totalorder %s24, 0
    %p307 = por %p305, %p306
    %s309 = sadd.s32 %s308, 1
    %p312 = scmp.eq.s32.totalorder %s18, 5
    %p313 = scmp.ne.s32.totalorder %s308, %s310
    %p314 = scmp.eq.s32.totalorder %s18, 0
    %p315 = por %p313, %p314
    %p316 = scmp.ne.s32.totalorder %s308, %s310
    %p317 = scmp.eq.s32.totalorder %s23, 5
    %p318 = por %p316, %p317
    %p319 = scmp.ne.s32.totalorder %s310, %s311
    %p320 = scmp.eq.s32.totalorder %s23, 0
    %p321 = por %p319, %p320
    %p322 = scmp.ne.s32.totalorder %s310, %s311
    %p323 = scmp.eq.s32.totalorder %s24, 5
    %p324 = por %p322, %p323
    %p326 = scmp.ne.s32.totalorder %s311, %s325
    %p327 = scmp.eq.s32.totalorder %s24, 0
    %p328 = por %p326, %p327
    %s329 = ssub.s32 %s25, %s44
    %s330 = ssub.s32 %s26, %s40
    %s331 = sor.u32 %s329, %s330
    %p332 = scmp.eq.s32.totalorder %s331, 0
    %s334 = sadd.s32 %s333, 1
    %s335 = scalar_select %p332, %s333, %s334
    %p338 = pneg %p332
    %p339 = scmp.eq.s32.totalorder %s18, 5
    %p340 = por %p338, %p339
    %p341 = scmp.ne.s32.totalorder %s333, %s336
    %p342 = scmp.eq.s32.totalorder %s18, 0
    %p343 = por %p341, %p342
    %p344 = scmp.ne.s32.totalorder %s333, %s336
    %p345 = scmp.eq.s32.totalorder %s23, 5
    %p346 = por %p344, %p345
    %p347 = scmp.ne.s32.totalorder %s336, %s337
    %p348 = scmp.eq.s32.totalorder %s23, 0
    %p349 = por %p347, %p348
    %p350 = scmp.ne.s32.totalorder %s336, %s337
    %p351 = scmp.eq.s32.totalorder %s24, 5
    %p352 = por %p350, %p351
    %p354 = scmp.ne.s32.totalorder %s337, %s353
    %p355 = scmp.eq.s32.totalorder %s24, 0
    %p356 = por %p354, %p355
    %s357 = ssub.s32 %s25, %s44
    %s358 = ssub.s32 %s26, %s40
    %s359 = sor.u32 %s357, %s358
    %p360 = scmp.eq.s32.totalorder %s359, 0
    %s362 = sadd.s32 %s361, 1
    %s363 = scalar_select %p360, %s361, %s362
    %p366 = pneg %p360
    %p367 = scmp.eq.s32.totalorder %s18, 5
    %p368 = por %p366, %p367
    %p369 = scmp.ne.s32.totalorder %s361, %s364
    %p370 = scmp.eq.s32.totalorder %s18, 0
    %p371 = por %p369, %p370
    %p372 = scmp.ne.s32.totalorder %s361, %s364
    %p373 = scmp.eq.s32.totalorder %s23, 5
    %p374 = por %p372, %p373
    %p375 = scmp.ne.s32.totalorder %s364, %s365
    %p376 = scmp.eq.s32.totalorder %s23, 0
    %p377 = por %p375, %p376
    %p378 = scmp.ne.s32.totalorder %s364, %s365
    %p379 = scmp.eq.s32.totalorder %s24, 5
    %p380 = por %p378, %p379
    %p382 = scmp.ne.s32.totalorder %s365, %s381
    %p383 = scmp.eq.s32.totalorder %s24, 0
    %p384 = por %p382, %p383
    %p385 = scmp.le.s32.totalorder 1, %s18
    %p386 = scmp.lt.s32.totalorder %s18, 7
    %p387 = pnand %p385, %p386
    %p388 = pneg %p387
    // Predicated region
    $region9: #{_aft_forward.3} parent=5 // pred_check
      _
    $region10: #{_aft_forward.3} parent=5 // pred_check_branch
      %390 = sbr.rel (%p387) target = $region12
    $region11: #{_aft_forward.3} parent=5 // pred_region
      %s391 = ssub.s32 %s18, 1
      // Predicated region
      $region13: #{_aft_forward.3} parent=11 // pred_check
        %p392 = pneg %p86
      $region14: #{_aft_forward.3} parent=11 // pred_check_branch
        %394 = sbr.rel (%p392) target = $region16
      $region15: #{_aft_forward.3} parent=11 // pred_region
        _
      $region16: #{_aft_forward.3} parent=11 // pred_fallthru
        _
      // Predicated region
      $region17: #{_aft_forward.3} parent=11 // pred_check
        %p395 = pneg %p107
      $region18: #{_aft_forward.3} parent=11 // pred_check_branch
        %397 = sbr.rel (%p395) target = $region20
      $region19: #{_aft_forward.3} parent=11 // pred_region
        _
      $region20: #{_aft_forward.3} parent=11 // pred_fallthru
        _
      // Predicated region
      $region21: #{_aft_forward.3} parent=11 // pred_check
        %p398 = pneg %p300
      $region22: #{_aft_forward.3} parent=11 // pred_check_branch
        %400 = sbr.rel (%p398) target = $region24
      $region23: #{_aft_forward.3} parent=11 // pred_region
        _
      $region24: #{_aft_forward.3} parent=11 // pred_fallthru
        _
      // Predicated region
      $region25: #{_aft_forward.3} parent=11 // pred_check
        %p401 = pneg %p321
      $region26: #{_aft_forward.3} parent=11 // pred_check_branch
        %403 = sbr.rel (%p401) target = $region28
      $region27: #{_aft_forward.3} parent=11 // pred_region
        _
      $region28: #{_aft_forward.3} parent=11 // pred_fallthru
        _
    $region12: #{_aft_forward.3} parent=5 // pred_fallthru
      _
    %p404 = scmp.lt.s32.totalorder %s18, 6
    // Predicated region
    $region29: #{_aft_forward.3} parent=5 // pred_check
      %p405 = pneg %p404
    $region30: #{_aft_forward.3} parent=5 // pred_check_branch
      %407 = sbr.rel (%p405) target = $region32
    $region31: #{_aft_forward.3} parent=5 // pred_region
      // Predicated region
      $region33: #{_aft_forward.3} parent=31 // pred_check
        %p408 = pneg %p59
      $region34: #{_aft_forward.3} parent=31 // pred_check_branch
        %410 = sbr.rel (%p408) target = $region36
      $region35: #{_aft_forward.3} parent=31 // pred_region
        %s411 = smul.u32 2, %s26
        %p412 = scmp.lt.s32.totalorder %s25, 1
        %s413 = scalar_select %p412, %s25, 1
        %p414 = scmp.lt.s32.totalorder %s411, 1
        %s415 = scalar_select %p414, %s411, 1
        %s416 = smul.addr %s413, 2
        %s417 = sadd.s32 %s415, %s416
        %s418 = smul.addr %s417, 4
        %s419 = scalar_lea.vmem %s0, %s418
        %s420 = smul.u32 2, %s26
      $region36: #{_aft_forward.3} parent=31 // pred_fallthru
        _
      // Predicated region
      $region37: #{_aft_forward.3} parent=31 // pred_check
        %p421 = pneg %p141
      $region38: #{_aft_forward.3} parent=31 // pred_check_branch
        %423 = sbr.rel (%p421) target = $region40
      $region39: #{_aft_forward.3} parent=31 // pred_region
        %s424 = sadd.s32 %s26, %s27
        %s425 = ssub.s32 %s424, 1
        %p426 = scmp.lt.s32.totalorder %s425, 0
        %s427 = scalar_select %p426, %s425, 0
        %p428 = scmp.gt.s32.totalorder %s427, 0
        %s429 = scalar_select %p428, %s427, 0
        %s430 = smul.u32 2, %s26
        %p431 = scmp.lt.s32.totalorder %s430, 1
        %s432 = scalar_select %p431, %s430, 1
        %p433 = scmp.lt.s32.totalorder %s429, 0
        %s434 = scalar_select %p433, %s429, 0
        %s435 = sadd.s32 %s434, %s432
        %s436 = smul.addr %s435, 4
        %s437 = scalar_lea.vmem %s3, %s436
        %s438 = sadd.s32 %s26, %s27
        %s439 = ssub.s32 %s438, 1
        %p440 = scmp.lt.s32.totalorder %s439, 0
        %s441 = scalar_select %p440, %s439, 0
        %p442 = scmp.gt.s32.totalorder %s441, 0
        %s443 = scalar_select %p442, %s441, 0
        %s444 = smul.u32 2, %s26
      $region40: #{_aft_forward.3} parent=31 // pred_fallthru
        _
      // Predicated region
      $region41: #{_aft_forward.3} parent=31 // pred_check
        %p445 = pneg %p181
      $region42: #{_aft_forward.3} parent=31 // pred_check_branch
        %447 = sbr.rel (%p445) target = $region44
      $region43: #{_aft_forward.3} parent=31 // pred_region
        %s448 = sadd.s32 %s26, %s27
        %s449 = ssub.s32 %s448, 1
        %p450 = scmp.lt.s32.totalorder %s449, 0
        %s451 = scalar_select %p450, %s449, 0
        %p452 = scmp.gt.s32.totalorder %s451, 0
        %s453 = scalar_select %p452, %s451, 0
        %s454 = smul.u32 2, %s453
        %p455 = scmp.lt.s32.totalorder %s25, 1
        %s456 = scalar_select %p455, %s25, 1
        %p457 = scmp.lt.s32.totalorder %s454, 1
        %s458 = scalar_select %p457, %s454, 1
        %s459 = smul.addr %s456, 2
        %s460 = sadd.s32 %s458, %s459
        %s461 = smul.addr %s460, 4
        %s462 = scalar_lea.vmem %s4, %s461
        %s463 = sadd.s32 %s26, %s27
        %s464 = ssub.s32 %s463, 1
        %p465 = scmp.lt.s32.totalorder %s464, 0
        %s466 = scalar_select %p465, %s464, 0
        %p467 = scmp.gt.s32.totalorder %s466, 0
        %s468 = scalar_select %p467, %s466, 0
        %s469 = smul.u32 2, %s468
      $region44: #{_aft_forward.3} parent=31 // pred_fallthru
        _
      // Predicated region
      $region45: #{_aft_forward.3} parent=31 // pred_check
        %p470 = pneg %p221
      $region46: #{_aft_forward.3} parent=31 // pred_check_branch
        %472 = sbr.rel (%p470) target = $region48
      $region47: #{_aft_forward.3} parent=31 // pred_region
        %s473 = sadd.s32 %s26, %s27
        %s474 = ssub.s32 %s473, 1
        %p475 = scmp.lt.s32.totalorder %s474, 0
        %s476 = scalar_select %p475, %s474, 0
        %p477 = scmp.gt.s32.totalorder %s476, 0
        %s478 = scalar_select %p477, %s476, 0
        %s479 = smul.u32 2, %s478
        %p480 = scmp.lt.s32.totalorder %s25, 1
        %s481 = scalar_select %p480, %s25, 1
        %p482 = scmp.lt.s32.totalorder %s479, 1
        %s483 = scalar_select %p482, %s479, 1
        %s484 = smul.addr %s481, 2
        %s485 = sadd.s32 %s483, %s484
        %s486 = smul.addr %s485, 4
        %s487 = scalar_lea.vmem %s5, %s486
        %s488 = sadd.s32 %s26, %s27
        %s489 = ssub.s32 %s488, 1
        %p490 = scmp.lt.s32.totalorder %s489, 0
        %s491 = scalar_select %p490, %s489, 0
        %p492 = scmp.gt.s32.totalorder %s491, 0
        %s493 = scalar_select %p492, %s491, 0
        %s494 = smul.u32 2, %s493
      $region48: #{_aft_forward.3} parent=31 // pred_fallthru
        _
      // Predicated region
      $region49: #{_aft_forward.3} parent=31 // pred_check
        %p495 = pneg %p247
      $region50: #{_aft_forward.3} parent=31 // pred_check_branch
        %497 = sbr.rel (%p495) target = $region52
      $region51: #{_aft_forward.3} parent=31 // pred_region
        %p498 = scmp.lt.s32.totalorder %s25, 1
        %s499 = scalar_select %p498, %s25, 1
        %s500 = scalar_lea.vmem %s6, %s499
      $region52: #{_aft_forward.3} parent=31 // pred_fallthru
        _
      // Predicated region
      $region53: #{_aft_forward.3} parent=31 // pred_check
        %p501 = pneg %p273
      $region54: #{_aft_forward.3} parent=31 // pred_check_branch
        %503 = sbr.rel (%p501) target = $region56
      $region55: #{_aft_forward.3} parent=31 // pred_region
        %p504 = scmp.lt.s32.totalorder %s25, 1
        %s505 = scalar_select %p504, %s25, 1
        %s506 = scalar_lea.vmem %s7, %s505
      $region56: #{_aft_forward.3} parent=31 // pred_fallthru
        _
    $region32: #{_aft_forward.3} parent=5 // pred_fallthru
      _
    %p507 = scmp.le.s32.totalorder 1, %s18
    %p508 = scmp.lt.s32.totalorder %s18, 7
    %p509 = pnand %p507, %p508
    %p510 = pneg %p509
    // Predicated region
    $region57: #{_aft_forward.3} parent=5 // pred_check
      _
    $region58: #{_aft_forward.3} parent=5 // pred_check_branch
      %512 = sbr.rel (%p509) target = $region60
    $region59: #{_aft_forward.3} parent=5 // pred_region
      %s513 = ssub.s32 %s18, 1
      %s514 = smul.u32 2, %s29
      %p515 = scmp.lt.s32.totalorder %s28, 1
      %s516 = scalar_select %p515, %s28, 1
      %p517 = scmp.lt.s32.totalorder %s514, 1
      %s518 = scalar_select %p517, %s514, 1
      %s519 = smul.addr %s516, 2
      %s520 = sadd.s32 %s518, %s519
      %s521 = smul.addr %s520, 4
      %s522 = scalar_lea.vmem %s0, %s521
      %p523 = pneg %p65
      %p524 = pneg %p62
      %p525 = pneg %p86
      %p526 = pneg %p83
      %p527 = pneg %p107
      %p528 = pneg %p104
      %s529 = sadd.s32 %s29, %s30
      %s530 = ssub.s32 %s529, 1
      %p531 = scmp.lt.s32.totalorder %s530, 0
      %s532 = scalar_select %p531, %s530, 0
      %p533 = scmp.gt.s32.totalorder %s532, 0
      %s534 = scalar_select %p533, %s532, 0
      %s535 = smul.u32 2, %s29
      %p536 = scmp.lt.s32.totalorder %s535, 1
      %s537 = scalar_select %p536, %s535, 1
      %p538 = scmp.lt.s32.totalorder %s534, 0
      %s539 = scalar_select %p538, %s534, 0
      %s540 = sadd.s32 %s539, %s537
      %s541 = smul.addr %s540, 4
      %s542 = scalar_lea.vmem %s3, %s541
      %p543 = pneg %p147
      %p544 = pneg %p144
      %s545 = sadd.s32 %s29, %s30
      %s546 = ssub.s32 %s545, 1
      %p547 = scmp.lt.s32.totalorder %s546, 0
      %s548 = scalar_select %p547, %s546, 0
      %p549 = scmp.gt.s32.totalorder %s548, 0
      %s550 = scalar_select %p549, %s548, 0
      %s551 = smul.u32 2, %s550
      %p552 = scmp.lt.s32.totalorder %s28, 1
      %s553 = scalar_select %p552, %s28, 1
      %p554 = scmp.lt.s32.totalorder %s551, 1
      %s555 = scalar_select %p554, %s551, 1
      %s556 = smul.addr %s553, 2
      %s557 = sadd.s32 %s555, %s556
      %s558 = smul.addr %s557, 4
      %s559 = scalar_lea.vmem %s4, %s558
      %p560 = pneg %p187
      %p561 = pneg %p184
      %s562 = sadd.s32 %s29, %s30
      %s563 = ssub.s32 %s562, 1
      %p564 = scmp.lt.s32.totalorder %s563, 0
      %s565 = scalar_select %p564, %s563, 0
      %p566 = scmp.gt.s32.totalorder %s565, 0
      %s567 = scalar_select %p566, %s565, 0
      %s568 = smul.u32 2, %s567
      %p569 = scmp.lt.s32.totalorder %s28, 1
      %s570 = scalar_select %p569, %s28, 1
      %p571 = scmp.lt.s32.totalorder %s568, 1
      %s572 = scalar_select %p571, %s568, 1
      %s573 = smul.addr %s570, 2
      %s574 = sadd.s32 %s572, %s573
      %s575 = smul.addr %s574, 4
      %s576 = scalar_lea.vmem %s5, %s575
      %p577 = pneg %p227
      %p578 = pneg %p224
      %p579 = scmp.lt.s32.totalorder %s28, 1
      %s580 = scalar_select %p579, %s28, 1
      %s581 = scalar_lea.vmem %s6, %s580
      %p582 = pneg %p253
      %p583 = pneg %p250
      %p584 = scmp.lt.s32.totalorder %s28, 1
      %s585 = scalar_select %p584, %s28, 1
      %s586 = scalar_lea.vmem %s7, %s585
      %p587 = pneg %p279
      %p588 = pneg %p276
      %p589 = pneg %p300
      %p590 = pneg %p297
      %p591 = pneg %p321
      %p592 = pneg %p318
      %p593 = pneg %p349
      %p594 = pneg %p346
      %s595 = smul.u32 2, %s29
      %p596 = scmp.lt.s32.totalorder %s28, 1
      %s597 = scalar_select %p596, %s28, 1
      %p598 = scmp.lt.s32.totalorder %s595, 1
      %s599 = scalar_select %p598, %s595, 1
      %s600 = smul.addr %s597, 2
      %s601 = sadd.s32 %s599, %s600
      %s602 = smul.addr %s601, 8
      %s603 = scalar_lea.vmem %s10, %s602
      %p604 = pneg %p377
      %p605 = pneg %p374
      %s606 = smul.u32 2, %s29
      %p607 = scmp.lt.s32.totalorder %s28, 1
      %s608 = scalar_select %p607, %s28, 1
      %p609 = scmp.lt.s32.totalorder %s606, 1
      %s610 = scalar_select %p609, %s606, 1
      %s611 = smul.addr %s608, 2
      %s612 = sadd.s32 %s610, %s611
      %s613 = smul.addr %s612, 4
      %s614 = scalar_lea.vmem %s11, %s613
      %s615 = smul.u32 2, %s29
      %p616 = scmp.lt.s32.totalorder %s28, 1
      %s617 = scalar_select %p616, %s28, 1
      %p618 = scmp.lt.s32.totalorder %s615, 1
      %s619 = scalar_select %p618, %s615, 1
      %s620 = smul.addr %s617, 2
      %s621 = sadd.s32 %s619, %s620
      %s622 = smul.addr %s621, 4
      %s623 = scalar_lea.vmem %s0, %s622
      %s624 = smul.u32 2, %s29
      %s625 = sadd.s32 %s29, %s30
      %s626 = ssub.s32 %s625, 1
      %p627 = scmp.lt.s32.totalorder %s626, 0
      %s628 = scalar_select %p627, %s626, 0
      %p629 = scmp.gt.s32.totalorder %s628, 0
      %s630 = scalar_select %p629, %s628, 0
      %s631 = smul.u32 2, %s29
      %p632 = scmp.lt.s32.totalorder %s631, 1
      %s633 = scalar_select %p632, %s631, 1
      %p634 = scmp.lt.s32.totalorder %s630, 0
      %s635 = scalar_select %p634, %s630, 0
      %s636 = sadd.s32 %s635, %s633
      %s637 = smul.addr %s636, 4
      %s638 = scalar_lea.vmem %s3, %s637
      %s639 = sadd.s32 %s29, %s30
      %s640 = ssub.s32 %s639, 1
      %p641 = scmp.lt.s32.totalorder %s640, 0
      %s642 = scalar_select %p641, %s640, 0
      %p643 = scmp.gt.s32.totalorder %s642, 0
      %s644 = scalar_select %p643, %s642, 0
      %s645 = smul.u32 2, %s29
      %s646 = sadd.s32 %s29, %s30
      %s647 = ssub.s32 %s646, 1
      %p648 = scmp.lt.s32.totalorder %s647, 0
      %s649 = scalar_select %p648, %s647, 0
      %p650 = scmp.gt.s32.totalorder %s649, 0
      %s651 = scalar_select %p650, %s649, 0
      %s652 = smul.u32 2, %s651
      %p653 = scmp.lt.s32.totalorder %s28, 1
      %s654 = scalar_select %p653, %s28, 1
      %p655 = scmp.lt.s32.totalorder %s652, 1
      %s656 = scalar_select %p655, %s652, 1
      %s657 = smul.addr %s654, 2
      %s658 = sadd.s32 %s656, %s657
      %s659 = smul.addr %s658, 4
      %s660 = scalar_lea.vmem %s4, %s659
      %s661 = sadd.s32 %s29, %s30
      %s662 = ssub.s32 %s661, 1
      %p663 = scmp.lt.s32.totalorder %s662, 0
      %s664 = scalar_select %p663, %s662, 0
      %p665 = scmp.gt.s32.totalorder %s664, 0
      %s666 = scalar_select %p665, %s664, 0
      %s667 = smul.u32 2, %s666
      %s668 = sadd.s32 %s29, %s30
      %s669 = ssub.s32 %s668, 1
      %p670 = scmp.lt.s32.totalorder %s669, 0
      %s671 = scalar_select %p670, %s669, 0
      %p672 = scmp.gt.s32.totalorder %s671, 0
      %s673 = scalar_select %p672, %s671, 0
      %s674 = smul.u32 2, %s673
      %p675 = scmp.lt.s32.totalorder %s28, 1
      %s676 = scalar_select %p675, %s28, 1
      %p677 = scmp.lt.s32.totalorder %s674, 1
      %s678 = scalar_select %p677, %s674, 1
      %s679 = smul.addr %s676, 2
      %s680 = sadd.s32 %s678, %s679
      %s681 = smul.addr %s680, 4
      %s682 = scalar_lea.vmem %s5, %s681
      %s683 = sadd.s32 %s29, %s30
      %s684 = ssub.s32 %s683, 1
      %p685 = scmp.lt.s32.totalorder %s684, 0
      %s686 = scalar_select %p685, %s684, 0
      %p687 = scmp.gt.s32.totalorder %s686, 0
      %s688 = scalar_select %p687, %s686, 0
      %s689 = smul.u32 2, %s688
      %p690 = scmp.lt.s32.totalorder %s28, 1
      %s691 = scalar_select %p690, %s28, 1
      %s692 = scalar_lea.vmem %s6, %s691
      %p693 = scmp.lt.s32.totalorder %s28, 1
      %s694 = scalar_select %p693, %s28, 1
      %s695 = scalar_lea.vmem %s7, %s694
      %s696 = smul.u32 2, %s29
      %p697 = scmp.lt.s32.totalorder %s28, 1
      %s698 = scalar_select %p697, %s28, 1
      %p699 = scmp.lt.s32.totalorder %s696, 1
      %s700 = scalar_select %p699, %s696, 1
      %s701 = smul.addr %s698, 2
      %s702 = sadd.s32 %s700, %s701
      %s703 = smul.addr %s702, 8
      %s704 = scalar_lea.vmem %s10, %s703
      %s705 = smul.u32 2, %s29
      %s706 = smul.u32 2, %s29
      %p707 = scmp.lt.s32.totalorder %s28, 1
      %s708 = scalar_select %p707, %s28, 1
      %p709 = scmp.lt.s32.totalorder %s706, 1
      %s710 = scalar_select %p709, %s706, 1
      %s711 = smul.addr %s708, 2
      %s712 = sadd.s32 %s710, %s711
      %s713 = smul.addr %s712, 4
      %s714 = scalar_lea.vmem %s11, %s713
      %s715 = smul.u32 2, %s29
      %s717 = sadd.s32 %s29, %s30
      %s718 = ssub.s32 %s717, 1
      %p719 = scmp.eq.s32.totalorder %s30, 0
      // Predicated region
      $region61: #{_aft_forward.3} parent=59 // pred_check
        %p720 = pneg %p719
      $region62: #{_aft_forward.3} parent=59 // pred_check_branch
        %722 = sbr.rel (%p720) target = $region64
      $region63: #{_aft_forward.3} parent=59 // pred_region
        %v723 = vld [vmem:[%s695] sm:$0x1]
        %v725 = vperm.slane %v723, 0
        %727 = vst [vmem:[#allocation2] sm:$0xff] %v725
        %728 = vst [vmem:[#allocation2 + $0x8] sm:$0xff] %v725
        %v729 = vld [vmem:[%s692] sm:$0x1]
        %v731 = vperm.slane %v729, 0
        %733 = vst [vmem:[#allocation3] sm:$0xff] %v731
        %734 = vst [vmem:[#allocation3 + $0x8] sm:$0xff] %v731
      $region64: #{_aft_forward.3} parent=59 // pred_fallthru
        _
      %p735 = scmp.ge.s32.totalorder %s718, 0
      %p736 = scmp.lt.s32.totalorder %s718, 1
      %p737 = pnand %p735, %p736
      %p738 = pneg %p737
      // Predicated region
      $region65: #{_aft_forward.3} parent=59 // pred_check
        _
      $region66: #{_aft_forward.3} parent=59 // pred_check_branch
        %740 = sbr.rel (%p737) target = $region68
      $region67: #{_aft_forward.3} parent=59 // pred_region
        %v741 = vld [vmem:[%s638] sm:$0xf]
        %v742 = vld [vmem:[%s638 + $0x4] sm:$0xf]
        %v743 = vld [vmem:[#allocation2] sm:$0xff]
        %v744 = vld [vmem:[#allocation2 + $0x8] sm:$0xff]
        %v745 = vld [vmem:[%s682] sm:$0xf]
        %v746 = vld [vmem:[%s682 + $0x4] sm:$0xf]
        %v749 = vunpack.c.l.b16 %v741
        %v750 = vunpack.c.l.b16 %v742
        %v751 = vpack.c.b16 %v750, %v749
        %v754 = vunpack.c.l.b16 %v745
        %v755 = vunpack.c.l.b16 %v746
        %v756 = vpack.c.b16 %v755, %v754
        %vm758 = vcmask 130048
        %v760 = vsel %vm758, %v751, 0
        %762 = vmatpush.bf16.msra.mxu0 0
        %763 = vmatpush.bf16.msra.mxu0 0
        %764 = vmatpush.bf16.msra.mxu0 0
        %765 = vmatpush.bf16.msra.mxu0 0
        %766 = vmatpush.bf16.msra.mxu0 0
        %767 = vmatpush.bf16.msra.mxu0 0
        %768 = vmatpush.bf16.msra.mxu0 0
        %769 = vmatpush.bf16.msra.mxu0 %v756
        %770 = vmatmul.bf16.gmra.mxu0 %v760
        %v771 = vpop.f32.mrf.mxu0
        %v772 = vadd.f32 0.0, %v771
        %v773 = vpop.f32.mrf.mxu0
        %v774 = vadd.f32 0.0, %v773
        %775 = vdwg.mxu0
        %v776 = vadd.f32 %v743, %v772
        %v777 = vadd.f32 %v744, %v774
        %778 = vst [vmem:[#allocation2] sm:$0xff] %v776
        %779 = vst [vmem:[#allocation2 + $0x8] sm:$0xff] %v777
        %v780 = vld [vmem:[#allocation3] sm:$0xff]
        %v781 = vld [vmem:[#allocation3 + $0x8] sm:$0xff]
        %v782 = vld [vmem:[%s660] sm:$0xf]
        %v783 = vld [vmem:[%s660 + $0x4] sm:$0xf]
        %v786 = vunpack.c.l.b16 %v782
        %v787 = vunpack.c.l.b16 %v783
        %v788 = vpack.c.b16 %v787, %v786
        %790 = vmatpush.bf16.msra.mxu0 0
        %791 = vmatpush.bf16.msra.mxu0 0
        %792 = vmatpush.bf16.msra.mxu0 0
        %793 = vmatpush.bf16.msra.mxu0 0
        %794 = vmatpush.bf16.msra.mxu0 0
        %795 = vmatpush.bf16.msra.mxu0 0
        %796 = vmatpush.bf16.msra.mxu0 0
        %797 = vmatpush.bf16.msra.mxu0 %v788
        %798 = vmatmul.bf16.gmra.mxu0 %v760
        %v799 = vpop.f32.mrf.mxu0
        %v800 = vadd.f32 0.0, %v799
        %v801 = vpop.f32.mrf.mxu0
        %v802 = vadd.f32 0.0, %v801
        %803 = vdwg.mxu0
        %v804 = vadd.f32 %v780, %v800
        %v805 = vadd.f32 %v781, %v802
        %806 = vst [vmem:[#allocation3] sm:$0xff] %v804
        %807 = vst [vmem:[#allocation3 + $0x8] sm:$0xff] %v805
      $region68: #{_aft_forward.3} parent=59 // pred_fallthru
        _
      %p808 = scmp.eq.s32.totalorder %s30, 2
      // Predicated region
      $region69: #{_aft_forward.3} parent=59 // pred_check
        %p809 = pneg %p808
      $region70: #{_aft_forward.3} parent=59 // pred_check_branch
        %811 = sbr.rel (%p809) target = $region72
      $region71: #{_aft_forward.3} parent=59 // pred_region
        %v812 = vld [vmem:[%s623] sm:$0xf]
        %v813 = vld [vmem:[%s623 + $0x4] sm:$0xf]
        %v814 = vld [vmem:[%s1] sm:$0xf]
        %v815 = vld [vmem:[%s1 + $0x4] sm:$0xf]
        %v816 = vld [vmem:[%s1 + $0x8] sm:$0xf]
        %v817 = vld [vmem:[%s1 + $0xc] sm:$0xf]
        %v818 = vld [vmem:[%s1 + $0x10] sm:$0xf]
        %v819 = vld [vmem:[%s1 + $0x14] sm:$0xf]
        %v820 = vld [vmem:[%s1 + $0x18] sm:$0xf]
        %v821 = vld [vmem:[%s1 + $0x1c] sm:$0xf]
        %v822 = vld [vmem:[%s1 + $0x20] sm:$0xf]
        %v823 = vld [vmem:[%s1 + $0x24] sm:$0xf]
        %v824 = vld [vmem:[%s1 + $0x28] sm:$0xf]
        %v825 = vld [vmem:[%s1 + $0x2c] sm:$0xf]
        %v826 = vld [vmem:[%s1 + $0x30] sm:$0xf]
        %v827 = vld [vmem:[%s1 + $0x34] sm:$0xf]
        %v828 = vld [vmem:[%s1 + $0x38] sm:$0xf]
        %v829 = vld [vmem:[%s1 + $0x3c] sm:$0xf]
        %v830 = vld [vmem:[%s2] sm:$0x1]
        %v832 = vperm.slane %v830, 0
        %v836 = vunpack.c.l.b16 %v812
        %v837 = vunpack.c.l.b16 %v813
        %v838 = vpack.c.b16 %v837, %v836
        %v856 = vunpack.c.l.b16 %v814
        %v857 = vunpack.c.l.b16 %v815
        %v858 = vunpack.c.l.b16 %v816
        %v859 = vunpack.c.l.b16 %v817
        %v860 = vunpack.c.l.b16 %v818
        %v861 = vunpack.c.l.b16 %v819
        %v862 = vunpack.c.l.b16 %v820
        %v863 = vunpack.c.l.b16 %v821
        %v864 = vunpack.c.l.b16 %v822
        %v865 = vunpack.c.l.b16 %v823
        %v866 = vunpack.c.l.b16 %v824
        %v867 = vunpack.c.l.b16 %v825
        %v868 = vunpack.c.l.b16 %v826
        %v869 = vunpack.c.l.b16 %v827
        %v870 = vunpack.c.l.b16 %v828
        %v871 = vunpack.c.l.b16 %v829
        %v872 = vpack.c.b16 %v857, %v856
        %v873 = vpack.c.b16 %v859, %v858
        %v874 = vpack.c.b16 %v861, %v860
        %v875 = vpack.c.b16 %v863, %v862
        %v876 = vpack.c.b16 %v865, %v864
        %v877 = vpack.c.b16 %v867, %v866
        %v878 = vpack.c.b16 %v869, %v868
        %v879 = vpack.c.b16 %v871, %v870
        %888 = vmatpush.bf16.msra.mxu0 %v879
        %889 = vmatpush.bf16.msra.mxu0 %v878
        %890 = vmatpush.bf16.msra.mxu0 %v877
        %891 = vmatpush.bf16.msra.mxu0 %v876
        %892 = vmatpush.bf16.msra.mxu0 %v875
        %893 = vmatpush.bf16.msra.mxu0 %v874
        %894 = vmatpush.bf16.msra.mxu0 %v873
        %895 = vmatpush.bf16.msra.mxu0 %v872
        %896 = vmatmul.bf16.gmra.mxu0 %v838
        %v897 = vpop.f32.mrf.mxu0
        %v898 = vadd.f32 %v832, %v897
        %v899 = vpop.f32.mrf.mxu0
        %v900 = vadd.f32 %v832, %v899
        %901 = vdwg.mxu0
        %v902 = vxor.u32 %v898, 2147483648
        %v903 = vxor.u32 %v900, 2147483648
        %v904 = vmul.f32 %v902, 1.442695
        %v905 = vpow.pop %v904
        %v906 = vmul.f32 %v903, 1.442695
        %v907 = vpow.pop %v906
        %v908 = vadd.f32 %v905, 1.0
        %v909 = vadd.f32 %v907, 1.0
        %v910 = vrcp.pop %v908
        %v911 = vmul.f32 %v908, %v910
        %v912 = vsub.f32 1.0, %v911
        %v913 = vmul.f32 %v910, %v912
        %v914 = vadd.f32 %v910, %v913
        %vm915 = vweird.f32 %v908
        %vm916 = vweird.f32 %v910
        %vm917 = vmor %vm915, %vm916
        %v918 = vsel %vm917, %v910, %v914
        %v919 = vand.u32 2147483647, %v908
        %vm920 = vcmp.eq.f32.partialorder %v919, 8.507059e+37
        %v921 = vand.u32 %v908, 2147483648
        %v922 = vor.u32 1.1754944e-38, %v921
        %v923 = vsel %vm920, %v922, %v918
        %v924 = vmul.f32 1.0, %v923
        %v925 = vrcp.pop %v909
        %v926 = vmul.f32 %v909, %v925
        %v927 = vsub.f32 1.0, %v926
        %v928 = vmul.f32 %v925, %v927
        %v929 = vadd.f32 %v925, %v928
        %vm930 = vweird.f32 %v909
        %vm931 = vweird.f32 %v925
        %vm932 = vmor %vm930, %vm931
        %v933 = vsel %vm932, %v925, %v929
        %v934 = vand.u32 2147483647, %v909
        %vm935 = vcmp.eq.f32.partialorder %v934, 8.507059e+37
        %v936 = vand.u32 %v909, 2147483648
        %v937 = vor.u32 1.1754944e-38, %v936
        %v938 = vsel %vm935, %v937, %v933
        %v939 = vmul.f32 1.0, %v938
        %v940 = vld [vmem:[#allocation2] sm:$0xff]
        %v941 = vld [vmem:[#allocation2 + $0x8] sm:$0xff]
        %v942 = vmul.f32 %v924, %v940
        %v943 = vmul.f32 %v939, %v941
        %v944 = vld [vmem:[#allocation3] sm:$0xff]
        %v945 = vld [vmem:[#allocation3 + $0x8] sm:$0xff]
        %v946 = vrcp.pop %v944
        %v947 = vrcp.pop %v945
        %v948 = vmul.f32 %v942, %v946
        %v949 = vmul.f32 %v943, %v947
        %v950 = vpack.c.bf16 %v949, %v948
        %v951 = vld [vmem:[%s8] sm:$0xf]
        %v952 = vld [vmem:[%s8 + $0x4] sm:$0xf]
        %v953 = vld [vmem:[%s8 + $0x8] sm:$0xf]
        %v954 = vld [vmem:[%s8 + $0xc] sm:$0xf]
        %v955 = vld [vmem:[%s8 + $0x10] sm:$0xf]
        %v956 = vld [vmem:[%s8 + $0x14] sm:$0xf]
        %v957 = vld [vmem:[%s8 + $0x18] sm:$0xf]
        %v958 = vld [vmem:[%s8 + $0x1c] sm:$0xf]
        %v959 = vld [vmem:[%s8 + $0x20] sm:$0xf]
        %v960 = vld [vmem:[%s8 + $0x24] sm:$0xf]
        %v961 = vld [vmem:[%s8 + $0x28] sm:$0xf]
        %v962 = vld [vmem:[%s8 + $0x2c] sm:$0xf]
        %v963 = vld [vmem:[%s8 + $0x30] sm:$0xf]
        %v964 = vld [vmem:[%s8 + $0x34] sm:$0xf]
        %v965 = vld [vmem:[%s8 + $0x38] sm:$0xf]
        %v966 = vld [vmem:[%s8 + $0x3c] sm:$0xf]
        %v967 = vld [vmem:[%s9] sm:$0x1]
        %v969 = vperm.slane %v967, 0
        %v987 = vunpack.c.l.b16 %v951
        %v988 = vunpack.c.l.b16 %v952
        %v989 = vunpack.c.l.b16 %v953
        %v990 = vunpack.c.l.b16 %v954
        %v991 = vunpack.c.l.b16 %v955
        %v992 = vunpack.c.l.b16 %v956
        %v993 = vunpack.c.l.b16 %v957
        %v994 = vunpack.c.l.b16 %v958
        %v995 = vunpack.c.l.b16 %v959
        %v996 = vunpack.c.l.b16 %v960
        %v997 = vunpack.c.l.b16 %v961
        %v998 = vunpack.c.l.b16 %v962
        %v999 = vunpack.c.l.b16 %v963
        %v1000 = vunpack.c.l.b16 %v964
        %v1001 = vunpack.c.l.b16 %v965
        %v1002 = vunpack.c.l.b16 %v966
        %v1003 = vpack.c.b16 %v988, %v987
        %v1004 = vpack.c.b16 %v990, %v989
        %v1005 = vpack.c.b16 %v992, %v991
        %v1006 = vpack.c.b16 %v994, %v993
        %v1007 = vpack.c.b16 %v996, %v995
        %v1008 = vpack.c.b16 %v998, %v997
        %v1009 = vpack.c.b16 %v1000, %v999
        %v1010 = vpack.c.b16 %v1002, %v1001
        %1019 = vmatpush.bf16.msra.mxu0 %v1010
        %1020 = vmatpush.bf16.msra.mxu0 %v1009
        %1021 = vmatpush.bf16.msra.mxu0 %v1008
        %1022 = vmatpush.bf16.msra.mxu0 %v1007
        %1023 = vmatpush.bf16.msra.mxu0 %v1006
        %1024 = vmatpush.bf16.msra.mxu0 %v1005
        %1025 = vmatpush.bf16.msra.mxu0 %v1004
        %1026 = vmatpush.bf16.msra.mxu0 %v1003
        %1027 = vmatmul.bf16.gmra.mxu0 %v950
        %v1028 = vpop.f32.mrf.mxu0
        %v1029 = vadd.f32 %v969, %v1028
        %v1030 = vpop.f32.mrf.mxu0
        %v1031 = vadd.f32 %v969, %v1030
        %1032 = vdwg.mxu0
        %1033 = vst [vmem:[%s704] sm:$0xff] %v1029
        %1034 = vst [vmem:[%s704 + $0x8] sm:$0xff] %v1031
        %v1035 = vpack.c.bf16 %v942, %v942
        %v1036 = vpack.c.bf16 %v943, %v943
        %1037 = vst [vmem:[%s714] sm:$0xf] %v1035
        %1038 = vst [vmem:[%s714 + $0x4] sm:$0xf] %v1036
      $region72: #{_aft_forward.3} parent=59 // pred_fallthru
        _
      %s1039 = smul.u32 2, %s29
      %p1040 = scmp.lt.s32.totalorder %s28, 1
      %s1041 = scalar_select %p1040, %s28, 1
      %p1042 = scmp.lt.s32.totalorder %s1039, 1
      %s1043 = scalar_select %p1042, %s1039, 1
      %s1044 = smul.addr %s1041, 2
      %s1045 = sadd.s32 %s1043, %s1044
      %s1046 = smul.addr %s1045, 8
      %s1047 = scalar_lea.vmem %s10, %s1046
      %s1048 = smul.u32 2, %s29
      %p1049 = scmp.lt.s32.totalorder %s28, 1
      %s1050 = scalar_select %p1049, %s28, 1
      %p1051 = scmp.lt.s32.totalorder %s1048, 1
      %s1052 = scalar_select %p1051, %s1048, 1
      %s1053 = smul.addr %s1050, 2
      %s1054 = sadd.s32 %s1052, %s1053
      %s1055 = smul.addr %s1054, 4
      %s1056 = scalar_lea.vmem %s11, %s1055
      // Predicated region
      $region73: #{_aft_forward.3} parent=59 // pred_check
        %p1057 = pneg %p346
      $region74: #{_aft_forward.3} parent=59 // pred_check_branch
        %1059 = sbr.rel (%p1057) target = $region76
      $region75: #{_aft_forward.3} parent=59 // pred_region
        %s1060 = smul.u32 2, %s29
      $region76: #{_aft_forward.3} parent=59 // pred_fallthru
        _
      // Predicated region
      $region77: #{_aft_forward.3} parent=59 // pred_check
        %p1061 = pneg %p374
      $region78: #{_aft_forward.3} parent=59 // pred_check_branch
        %1063 = sbr.rel (%p1061) target = $region80
      $region79: #{_aft_forward.3} parent=59 // pred_region
        %s1064 = smul.u32 2, %s29
      $region80: #{_aft_forward.3} parent=59 // pred_fallthru
        _
    $region60: #{_aft_forward.3} parent=5 // pred_fallthru
      _
    %p1065 = scmp.le.s32.totalorder 2, %s18
    // Predicated region
    $region81: #{_aft_forward.3} parent=5 // pred_check
      %p1066 = pneg %p1065
    $region82: #{_aft_forward.3} parent=5 // pred_check_branch
      %1068 = sbr.rel (%p1066) target = $region84
    $region83: #{_aft_forward.3} parent=5 // pred_region
      %s1069 = ssub.s32 %s18, 2
      // Predicated region
      $region85: #{_aft_forward.3} parent=83 // pred_check
        %p1070 = pneg %p352
      $region86: #{_aft_forward.3} parent=83 // pred_check_branch
        %1072 = sbr.rel (%p1070) target = $region88
      $region87: #{_aft_forward.3} parent=83 // pred_region
        %s1073 = smul.u32 2, %s32
        %p1074 = scmp.lt.s32.totalorder %s31, 1
        %s1075 = scalar_select %p1074, %s31, 1
        %p1076 = scmp.lt.s32.totalorder %s1073, 1
        %s1077 = scalar_select %p1076, %s1073, 1
        %s1078 = smul.addr %s1075, 2
        %s1079 = sadd.s32 %s1077, %s1078
        %s1080 = smul.addr %s1079, 8
        %s1081 = scalar_lea.vmem %s10, %s1080
      $region88: #{_aft_forward.3} parent=83 // pred_fallthru
        _
      // Predicated region
      $region89: #{_aft_forward.3} parent=83 // pred_check
        %p1082 = pneg %p380
      $region90: #{_aft_forward.3} parent=83 // pred_check_branch
        %1084 = sbr.rel (%p1082) target = $region92
      $region91: #{_aft_forward.3} parent=83 // pred_region
        %s1085 = smul.u32 2, %s32
        %p1086 = scmp.lt.s32.totalorder %s31, 1
        %s1087 = scalar_select %p1086, %s31, 1
        %p1088 = scmp.lt.s32.totalorder %s1085, 1
        %s1089 = scalar_select %p1088, %s1085, 1
        %s1090 = smul.addr %s1087, 2
        %s1091 = sadd.s32 %s1089, %s1090
        %s1092 = smul.addr %s1091, 4
        %s1093 = scalar_lea.vmem %s11, %s1092
      $region92: #{_aft_forward.3} parent=83 // pred_fallthru
        _
    $region84: #{_aft_forward.3} parent=5 // pred_fallthru
      _
  $region6: #{_aft_forward.3} parent=0 // loop_footer
    %s22 = sadd.s32 1, %s18
  $region7: #{_aft_forward.3} parent=0 // loop_footer_branch
    %17 = sbr.rel target = $region3
  $region8: #{_aft_forward.3} parent=0 // loop_exit
    _

</llo_original>
